<compile_context>
chip_gen: v7x
topology: tpu7x:2x2x1
jax: 0.10.0
libtpu: 0.0.40
codegen_flags: <defaults>
</compile_context>

<pallas_src>
import functools

import jax
import jax.numpy as jnp
from jax.experimental import pallas as pl
from jax.experimental.pallas import tpu as pltpu

EPS_BN = 1e-5
EPS_NORM = 1e-12


def _round_up(x, m):
    return ((x + m - 1) // m) * m


def _vmem_limit_bytes():
    """Generation-aware scoped-VMEM limit (v5e/v6e -> 96 MiB, v7x -> 48 MiB)."""
    cap = 64 << 20
    try:
        info = pltpu.get_tpu_info()
        cap = int(getattr(info, "vmem_capacity_bytes", cap))
    except Exception:
        pass
    return int(min(cap * 3 // 4, 96 << 20))


def _choose_hw_tile(hw, per_lane_bytes, resident_bytes, vmem_limit,
                    max_lanes=8192):
    """Largest lane (spatial) tile that fits the budget, residents accounted."""
    budget = vmem_limit - 2 * resident_bytes - (4 << 20)   # 4 MiB headroom
    budget = max(budget, 1 << 20)
    lanes = int(min(max_lanes, max(128, budget // max(per_lane_bytes, 1))))
    if hw <= lanes:
        return hw, hw, 1                    # single full-extent tile, no pad
    thw = (lanes // 512) * 512 if lanes >= 512 else (lanes // 128) * 128
    thw = max(thw, 128)
    hwp = _round_up(hw, thw)
    return thw, hwp, hwp // thw


# ----------------------------------------------------------------------------
# main-path compute (shared by both kernels), transposed layout (channels x T)
# ----------------------------------------------------------------------------
def _main_compute(s, inb, a, b, wv, wsum):
    # s (E, T) f32, inb (C, T) f32, a/b (E, 1) f32, wv (c_out, E) bf16,
    # wsum (c_out, C) bf16
    y = jnp.maximum(s * a + b, 0.0)                          # folded BN + ReLU
    inv = jax.lax.rsqrt(jnp.maximum(jnp.sum(y * y, axis=0, keepdims=True),
                                    EPS_NORM * EPS_NORM))    # EUP rsqrt
    yb = (y * inv).astype(jnp.bfloat16)
    value = jnp.dot(wv, yb, preferred_element_type=jnp.float32)    # (c_out, T)
    summed = jnp.dot(wsum, inb.astype(jnp.bfloat16),
                     preferred_element_type=jnp.float32)
    return value, value + summed


def _main_kernel(s_ref, inb_ref, a_ref, b_ref, wv_ref, wsum_ref,
                 feat_ref, val_ref):
    value, feat = _main_compute(s_ref[...], inb_ref[...], a_ref[...],
                                b_ref[...], wv_ref[...], wsum_ref[...])
    val_ref[...] = value
    feat_ref[...] = feat


def _fused_kernel(hw_real, thw,
                  s_ref, inb_ref, proj_ref, mask_ref, a_ref, b_ref,
                  wv_ref, wsum_ref, cen_ref, c2_ref, ent_ref, ts_ref,
                  feat_ref, val_ref, part_ref):
    s = s_ref[...]                                           # (E, T)
    value, feat = _main_compute(s, inb_ref[...], a_ref[...], b_ref[...],
                                wv_ref[...], wsum_ref[...])
    val_ref[...] = value
    feat_ref[...] = feat

    # --- subclass encoding: distances + label-masked argmax -----------------
    f = proj_ref[...]                                        # (D, T)
    d = (c2_ref[...] + jnp.sum(f * f, axis=0, keepdims=True)
         - 2.0 * jnp.dot(cen_ref[...], f,
                         preferred_element_type=jnp.float32))        # (K, T)
    col_max = jnp.max(d, axis=0, keepdims=True)              # (1, T)
    masked = mask_ref[...] * (col_max - d)                   # (K, T)
    m = jnp.max(masked, axis=0, keepdims=True)
    K = masked.shape[0]
    sub = jax.lax.broadcasted_iota(jnp.int32, masked.shape, 0)
    # first index achieving the max (matches torch.argmax tie-breaking)
    first = jnp.min(jnp.where(masked == m, sub, K), axis=0, keepdims=True)
    onehot = (sub == first).astype(jnp.float32)              # (K, T)
    # gather teacher rows via one-hot matmul (exactly what the torch code does)
    targets = jnp.dot(ts_ref[...], onehot,
                      preferred_element_type=jnp.float32)    # (E, T)
    ent_pos = jnp.sum(ent_ref[...] * onehot, axis=0, keepdims=True)   # (1, T)

    # --- KL(targets || softmax(scores)), batchmean contribution -------------
    mx = jnp.max(s, axis=0, keepdims=True)
    logp = s - (mx + jnp.log(jnp.sum(jnp.exp(s - mx), axis=0, keepdims=True)))
    contrib = ent_pos - jnp.sum(targets * logp, axis=0, keepdims=True)

    lane = jax.lax.broadcasted_iota(jnp.int32, contrib.shape, 1)
    valid = (pl.program_id(1) * thw + lane) < hw_real        # mask padded lanes
    partial = jnp.sum(jnp.where(valid, contrib, 0.0))

    row = jax.lax.broadcasted_iota(jnp.int32, (8, 128), 0)
    col = jax.lax.broadcasted_iota(jnp.int32, (8, 128), 1)
    part_ref[...] = jnp.where((row == 0) & (col == 0), partial, 0.0)


# ----------------------------------------------------------------------------
# pallas_call wrappers
# ----------------------------------------------------------------------------
def _main_call(scores_r, inb_r, bn_a, bn_b, wv_bf, wsum_bf):
    N, E, HW = scores_r.shape
    C = inb_r.shape[1]
    c_out = wv_bf.shape[0]
    vmem_limit = _vmem_limit_bytes()
    resident = 2 * c_out * (E + C) + 8 * E                   # Wv', Wsum', BN
    per_lane = 8 * (E + C) + 16 * c_out + 8 * E + 4 * C      # dbuf streams+temps
    thw, hwp, num_t = _choose_hw_tile(HW, per_lane, resident, vmem_limit)
    if hwp != HW:
        pad = ((0, 0), (0, 0), (0, hwp - HW))
        scores_r = jnp.pad(scores_r, pad)
        inb_r = jnp.pad(inb_r, pad)

    feat, value = pl.pallas_call(
        _main_kernel,
        out_shape=(jax.ShapeDtypeStruct((N, c_out, hwp), jnp.float32),
                   jax.ShapeDtypeStruct((N, c_out, hwp), jnp.float32)),
        grid_spec=pltpu.PrefetchScalarGridSpec(
            num_scalar_prefetch=0,
            grid=(N, num_t),
            in_specs=[
                pl.BlockSpec((None, E, thw), lambda n, t: (n, 0, t)),   # scores
                pl.BlockSpec((None, C, thw), lambda n, t: (n, 0, t)),   # in_block
                pl.BlockSpec((E, 1), lambda n, t: (0, 0)),              # bn a
                pl.BlockSpec((E, 1), lambda n, t: (0, 0)),              # bn b
                pl.BlockSpec((c_out, E), lambda n, t: (0, 0)),          # Wv'
                pl.BlockSpec((c_out, C), lambda n, t: (0, 0)),          # Wsum
            ],
            out_specs=[
                pl.BlockSpec((None, c_out, thw), lambda n, t: (n, 0, t)),
                pl.BlockSpec((None, c_out, thw), lambda n, t: (n, 0, t)),
            ],
        ),
        compiler_params=pltpu.CompilerParams(
            dimension_semantics=("parallel", "parallel"),
            vmem_limit_bytes=vmem_limit),
    )(scores_r, inb_r, bn_a, bn_b, wv_bf, wsum_bf)
    return feat[:, :, :HW], value[:, :, :HW]


def _fused_call(scores_r, inb_r, proj_r, label_mask, bn_a, bn_b, wv_bf,
                wsum_bf, centers, centers_sq, ent, ts_t):
    N, E, HW = scores_r.shape
    C = inb_r.shape[1]
    D = proj_r.shape[1]
    K = centers.shape[0]
    c_out = wv_bf.shape[0]
    vmem_limit = _vmem_limit_bytes()
    # TODO(synk): for emb_size ~4096 ts_t (E,K) f32 alone exceeds v7x VMEM;
    #             would need E-tiling or bf16 teacher scores.
    resident = (2 * c_out * (E + C) + 8 * E                  # Wv', Wsum', BN
                + 4 * K * (D + 3) + 4 * E * K)               # centers/c2/ent/ts
    per_lane = (8 * (E + C + D) + 16 * c_out                 # dbuf streams
                + 8 * E + 4 * C                              # main-path temps
                + 12 * K + 12 * E)                           # loss temps
    thw, hwp, num_t = _choose_hw_tile(HW, per_lane, resident, vmem_limit)
    if hwp != HW:
        pad = ((0, 0), (0, 0), (0, hwp - HW))
        scores_r = jnp.pad(scores_r, pad)
        inb_r = jnp.pad(inb_r, pad)
        proj_r = jnp.pad(proj_r, pad)

    kernel = functools.partial(_fused_kernel, HW, thw)
    feat, value, part = pl.pallas_call(
        kernel,
        out_shape=(jax.ShapeDtypeStruct((N, c_out, hwp), jnp.float32),
                   jax.ShapeDtypeStruct((N, c_out, hwp), jnp.float32),
                   jax.ShapeDtypeStruct((N * num_t * 8, 128), jnp.float32)),
        grid_spec=pltpu.PrefetchScalarGridSpec(
            num_scalar_prefetch=0,
            grid=(N, num_t),
            in_specs=[
                pl.BlockSpec((None, E, thw), lambda n, t: (n, 0, t)),   # scores
                pl.BlockSpec((None, C, thw), lambda n, t: (n, 0, t)),   # in_block
                pl.BlockSpec((None, D, thw), lambda n, t: (n, 0, t)),   # LDA teacher
                pl.BlockSpec((None, K, 1), lambda n, t: (n, 0, 0)),     # label mask
                pl.BlockSpec((E, 1), lambda n, t: (0, 0)),              # bn a
                pl.BlockSpec((E, 1), lambda n, t: (0, 0)),              # bn b
                pl.BlockSpec((c_out, E), lambda n, t: (0, 0)),          # Wv'
                pl.BlockSpec((c_out, C), lambda n, t: (0, 0)),          # Wsum
                pl.BlockSpec((K, D), lambda n, t: (0, 0)),              # centers
                pl.BlockSpec((K, 1), lambda n, t: (0, 0)),              # ||c||^2
                pl.BlockSpec((K, 1), lambda n, t: (0, 0)),              # entropies
                pl.BlockSpec((E, K), lambda n, t: (0, 0)),              # teacher^T
            ],
            out_specs=[
                pl.BlockSpec((None, c_out, thw), lambda n, t: (n, 0, t)),
                pl.BlockSpec((None, c_out, thw), lambda n, t: (n, 0, t)),
                pl.BlockSpec((8, 128), lambda n, t: (n * num_t + t, 0)),
            ],
        ),
        compiler_params=pltpu.CompilerParams(
            dimension_semantics=("parallel", "parallel"),
            vmem_limit_bytes=vmem_limit),
    )(scores_r, inb_r, proj_r, label_mask, bn_a, bn_b, wv_bf, wsum_bf,
      centers, centers_sq, ent, ts_t)
    loss = jnp.sum(part) / (N * HW)
    return feat[:, :, :HW], value[:, :, :HW], loss


# ----------------------------------------------------------------------------
# Jitted forward (no host sync, glue fuses with the kernels)
# ----------------------------------------------------------------------------
@functools.partial(jax.jit, static_argnames=("with_loss", "num_classes",
                                              "each_subclass", "lda_comp",
                                              "inp_size", "downscale"))
def _forward_impl(params, feature_teacher, scores, in_block, labels, *,
                  with_loss, num_classes, each_subclass, lda_comp, inp_size,
                  downscale):
    N, E, H, W = scores.shape
    HW = H * W
    scores_r = scores.reshape(N, E, HW)           # free NCHW reshape, no copy
    inb_r = in_block.reshape(N, inp_size, HW)

    # folded BatchNorm (inference mode) -> per-channel scale/shift
    bn_a = params["bn_gamma"] * jax.lax.rsqrt(params["bn_var"] + EPS_BN)
    bn_b = params["bn_beta"] - params["bn_mean"] * bn_a
    bn_a = bn_a.reshape(E, 1)
    bn_b = bn_b.reshape(E, 1)

    # cosine classifier weight: L2-normalize filters, fold the learnable scale
    wv = params["wv"]                                        # (c_out, E)
    inv_w = jax.lax.rsqrt(jnp.maximum(jnp.sum(wv * wv, axis=1, keepdims=True),
                                      EPS_NORM * EPS_NORM))
    wv_bf = (wv * inv_w * params["scale"][0, 0]).astype(jnp.bfloat16)
    wsum_bf = params["wsum"].astype(jnp.bfloat16)

    if with_loss:
        ft = feature_teacher
        if downscale:
            n_, c_, h_, w_ = ft.shape
            ft = ft.reshape(n_, c_, h_ // 2, 2, w_ // 2, 2).mean(axis=(3, 5))
        # LDA 1x1 conv, NCHW-native (tiny einsum, glue)
        w_lda = params["lda_scalings"].T                     # (K_lda, Ct)
        b_lda = -(w_lda @ params["lda_xbar"])
        proj = jnp.einsum("kc,nchw->nkhw", w_lda, ft) + b_lda[None, :, None, None]
        proj = proj[:, :lda_comp]                            # (N, D, h, w)
        n_, d_, h_, w_ = proj.shape
        # TODO(synk): original computes patches = H_teacher**2 (square maps assumed)
        assert n_ == N and h_ * w_ == HW
        proj_r = proj.reshape(N, d_, HW)

        onehot_lbl = jax.nn.one_hot(labels, num_classes, dtype=jnp.float32)
        label_mask = jnp.repeat(onehot_lbl, each_subclass, axis=1)[:, :, None]

        feat_r, value_r, loss = _fused_call(
            scores_r, inb_r, proj_r, label_mask, bn_a, bn_b, wv_bf, wsum_bf,
            params["centers"], params["centers_sq"], params["teacher_ent"],
            params["teacher_scores_t"])
    else:
        feat_r, value_r = _main_call(scores_r, inb_r, bn_a, bn_b, wv_bf, wsum_bf)
        loss = jnp.zeros((), jnp.float32)

    features = feat_r.reshape(N, inp_size, H, W)
    value = value_r.reshape(N, inp_size, H, W)
    return features, value, loss


# ----------------------------------------------------------------------------
# Module wrapper (parameter setup)
# ----------------------------------------------------------------------------
class ValueLayer1x1SumPallas:
    def __init__(self, inp_size, num_classes, emb_size, teacher_channels,
                 lda_comp, key, downscale=False):
        assert emb_size % num_classes == 0
        self.inp_size = inp_size
        self.num_classes = num_classes
        self.emb_size = emb_size
        self.each_subclass = emb_size // num_classes
        self.lda_comp = lda_comp
        self.downscale = downscale

        ks = jax.random.split(key, 10)
        # Conv2dCos(emb_size -> inp_size), bias=False, scale=1, learn_scale=True
        self.wv = jax.random.normal(ks[0], (inp_size, emb_size), jnp.float32) \
            * (2.0 / emb_size) ** 0.5
        self.scale = jnp.ones((1, 1), jnp.float32)
        # BatchNorm2d(emb_size) -- deterministic synthetic running stats/affine
        self.bn_gamma = jax.random.uniform(ks[1], (emb_size,), jnp.float32, 0.5, 1.5)
        self.bn_beta = jax.random.normal(ks[2], (emb_size,), jnp.float32) * 0.1
        self.bn_mean = jax.random.normal(ks[3], (emb_size,), jnp.float32) * 0.1
        self.bn_var = jax.random.uniform(ks[4], (emb_size,), jnp.float32, 0.5, 1.5)
        # conv_sum: Conv2d(inp_size, inp_size, kernel_size=1, bias=False)
        self.wsum = jax.random.normal(ks[5], (inp_size, inp_size), jnp.float32) \
            * (1.0 / inp_size) ** 0.5
        # LDA layer (frozen)
        self.lda_scalings = jax.random.normal(
            ks[6], (teacher_channels, lda_comp), jnp.float32) * 0.3
        self.lda_xbar = jax.random.normal(ks[7], (teacher_channels,), jnp.float32) * 0.3
        # cluster centers and teacher scores
        self.centers = jax.random.normal(ks[8], (emb_size, lda_comp), jnp.float32)
        self.teacher_scores = jax.nn.softmax(
            jax.random.normal(ks[9], (emb_size, emb_size), jnp.float32), axis=1)

        # one-time precomputed loss operands
        self.centers_sq = jnp.sum(self.centers * self.centers, axis=1,
                                  keepdims=True)                       # (K, 1)
        ts = self.teacher_scores
        self.teacher_ent = jnp.sum(
            jnp.where(ts > 0, ts * jnp.log(jnp.where(ts > 0, ts, 1.0)), 0.0),
            axis=1, keepdims=True)                                     # (K, 1)
        self.teacher_scores_t = ts.T                                   # (E, K)

    def _params(self):
        return dict(wv=self.wv, scale=self.scale, bn_gamma=self.bn_gamma,
                    bn_beta=self.bn_beta, bn_mean=self.bn_mean,
                    bn_var=self.bn_var, wsum=self.wsum,
                    lda_scalings=self.lda_scalings, lda_xbar=self.lda_xbar,
                    centers=self.centers, centers_sq=self.centers_sq,
                    teacher_ent=self.teacher_ent,
                    teacher_scores_t=self.teacher_scores_t)

    def forward(self, feature_teacher, scores, in_block, labels, record):
        with_loss = bool(record)
        features, value, loss = _forward_impl(
            self._params(), feature_teacher, scores, in_block, labels,
            with_loss=with_loss, num_classes=self.num_classes,
            each_subclass=self.each_subclass, lda_comp=self.lda_comp,
            inp_size=self.inp_size, downscale=self.downscale)
        if with_loss:
            # TODO(synk): original stores loss_sub.item(); keep the device
            # scalar to avoid a blocking device->host sync every step.
            record["loss_sub"] = loss
            return features, value, loss, record
        return features, value, [], record


# ----------------------------------------------------------------------------
# Pure-JAX reference (for correctness sanity check)
# ----------------------------------------------------------------------------
def _reference(layer, feature_teacher, scores, in_block, labels):
    N, E, H, W = scores.shape
    C = in_block.shape[1]
    a = (layer.bn_gamma * jax.lax.rsqrt(layer.bn_var + EPS_BN))[None, :]
    b = (layer.bn_beta - layer.bn_mean * a[0])[None, :]
    s_flat = jnp.transpose(scores, (0, 2, 3, 1)).reshape(-1, E)
    inb_flat = jnp.transpose(in_block, (0, 2, 3, 1)).reshape(-1, C)
    y = jnp.maximum(s_flat * a + b, 0.0)
    inv = jax.lax.rsqrt(jnp.maximum(jnp.sum(y * y, axis=1, keepdims=True),
                                    EPS_NORM * EPS_NORM))
    yb = (y * inv).astype(jnp.bfloat16)
    wv = layer.wv
    inv_w = jax.lax.rsqrt(jnp.maximum(jnp.sum(wv * wv, axis=1, keepdims=True),
                                      EPS_NORM * EPS_NORM))
    wv_t = (wv * inv_w * layer.scale[0, 0]).T.astype(jnp.bfloat16)
    value_flat = jnp.dot(yb, wv_t, preferred_element_type=jnp.float32)
    summed = jnp.dot(inb_flat.astype(jnp.bfloat16),
                     layer.wsum.T.astype(jnp.bfloat16),
                     preferred_element_type=jnp.float32)
    feat_flat = value_flat + summed
    features = jnp.transpose(feat_flat.reshape(N, H, W, C), (0, 3, 1, 2))
    value = jnp.transpose(value_flat.reshape(N, H, W, C), (0, 3, 1, 2))

    # loss branch (pure f32, matches torch semantics)
    ft = feature_teacher
    if layer.downscale:
        n_, c_, h_, w_ = ft.shape
        ft = ft.reshape(n_, c_, h_ // 2, 2, w_ // 2, 2).mean(axis=(3, 5))
    n, ct, h, w = ft.shape
    w_lda = layer.lda_scalings.T
    b_lda = -(w_lda @ layer.lda_xbar)
    proj = jnp.transpose(ft, (0, 2, 3, 1)).reshape(-1, ct) @ w_lda.T + b_lda
    proj = proj[:, :layer.lda_comp]
    d = (jnp.sum(proj ** 2, axis=1, keepdims=True)
         + jnp.sum(layer.centers ** 2, axis=1)[None, :]
         - 2.0 * proj @ layer.centers.T)
    row_max = jnp.max(d, axis=1, keepdims=True)
    patches = h * w
    onehot = jax.nn.one_hot(labels, layer.num_classes, dtype=jnp.float32)
    mask = jnp.repeat(jnp.repeat(onehot, layer.each_subclass, axis=1),
                      patches, axis=0)
    enc = jnp.argmax(mask * (row_max - d), axis=1)
    targets = layer.teacher_scores[enc]
    logp = jax.nn.log_softmax(s_flat, axis=1)
    xlogx = jnp.where(targets > 0,
                      targets * jnp.log(jnp.where(targets > 0, targets, 1.0)),
                      0.0)
    loss = jnp.sum(xlogx - targets * logp) / s_flat.shape[0]
    return features, value, loss


if __name__ == "__main__":
    key = jax.random.PRNGKey(0)
    N, H, W = 2, 4, 4
    inp_size = 8          # channels of in_block / value / features
    num_classes = 4
    emb_size = 16         # channels of `scores` (= number of subclass clusters)
    teacher_channels = 12
    lda_comp = 8

    keys = jax.random.split(key, 6)
    feature_teacher = jax.random.normal(keys[0], (N, teacher_channels, H, W), jnp.float32)
    scores = jax.random.normal(keys[1], (N, emb_size, H, W), jnp.float32)
    in_block = jax.random.normal(keys[2], (N, inp_size, H, W), jnp.float32)
    labels = jax.random.randint(keys[3], (N,), 0, num_classes, dtype=jnp.int32)

    layer = ValueLayer1x1SumPallas(inp_size, num_classes, emb_size,
                                   teacher_channels, lda_comp, keys[4])

    # record truthy -> fused main + loss kernel
    record = {"epoch": 0}
    features, value, loss_sub, record = layer.forward(
        feature_teacher, scores, in_block, labels, record)
    jax.block_until_ready((features, value, loss_sub))

    # record falsy -> main-only kernel (also exercised)
    f2, v2, _, _ = layer.forward(feature_teacher, scores, in_block, labels, {})
    jax.block_until_ready((f2, v2))

    # sanity check vs. pure-JAX reference
    ref_feat, ref_val, ref_loss = _reference(layer, feature_teacher, scores,
                                             in_block, labels)
    assert features.shape == (N, inp_size, H, W) and value.shape == features.shape
    assert jnp.allclose(features, ref_feat, rtol=5e-3, atol=5e-3)
    assert jnp.allclose(value, ref_val, rtol=5e-3, atol=5e-3)
    assert jnp.allclose(f2, ref_feat, rtol=5e-3, atol=5e-3)
    assert jnp.allclose(v2, ref_val, rtol=5e-3, atol=5e-3)
    assert jnp.allclose(loss_sub, ref_loss, rtol=5e-3, atol=5e-3)

    print("KERNEL_OK")
</pallas_src>

<mosaic_0001>
module attributes {stable_mosaic.version = 11 : i64} {
  func.func @_fused_kernel(%arg0: i32, %arg1: i32, %arg2: memref<1x16x16xf32, #tpu.memory_space<vmem>>, %arg3: memref<1x8x16xf32, #tpu.memory_space<vmem>>, %arg4: memref<1x8x16xf32, #tpu.memory_space<vmem>>, %arg5: memref<1x16x1xf32, #tpu.memory_space<vmem>>, %arg6: memref<16x1xf32, #tpu.memory_space<vmem>>, %arg7: memref<16x1xf32, #tpu.memory_space<vmem>>, %arg8: memref<8x16xbf16, #tpu.memory_space<vmem>>, %arg9: memref<8x8xbf16, #tpu.memory_space<vmem>>, %arg10: memref<16x8xf32, #tpu.memory_space<vmem>>, %arg11: memref<16x1xf32, #tpu.memory_space<vmem>>, %arg12: memref<16x1xf32, #tpu.memory_space<vmem>>, %arg13: memref<16x16xf32, #tpu.memory_space<vmem>>, %arg14: memref<1x8x16xf32, #tpu.memory_space<vmem>>, %arg15: memref<1x8x16xf32, #tpu.memory_space<vmem>>, %arg16: memref<8x128xf32, #tpu.memory_space<vmem>>) attributes {dimension_semantics = [#tpu.dimension_semantics<parallel>, #tpu.dimension_semantics<parallel>], iteration_bounds = array<i64: 2, 1>, scalar_prefetch = 0 : i64, scratch_operands = 0 : i64, tpu.core_type = #tpu.core_type<tc>, window_params = [{transform_indices = @transform_0, window_bounds = array<i64: 1, 16, 16>}, {transform_indices = @transform_1, window_bounds = array<i64: 1, 8, 16>}, {transform_indices = @transform_2, window_bounds = array<i64: 1, 8, 16>}, {transform_indices = @transform_3, window_bounds = array<i64: 1, 16, 1>}, {pipeline_mode = #tpu.pipeline_mode<synchronous>, transform_indices = @transform_4, window_bounds = array<i64: 16, 1>}, {pipeline_mode = #tpu.pipeline_mode<synchronous>, transform_indices = @transform_5, window_bounds = array<i64: 16, 1>}, {pipeline_mode = #tpu.pipeline_mode<synchronous>, transform_indices = @transform_6, window_bounds = array<i64: 8, 16>}, {pipeline_mode = #tpu.pipeline_mode<synchronous>, transform_indices = @transform_7, window_bounds = array<i64: 8, 8>}, {pipeline_mode = #tpu.pipeline_mode<synchronous>, transform_indices = @transform_8, window_bounds = array<i64: 16, 8>}, {pipeline_mode = #tpu.pipeline_mode<synchronous>, transform_indices = @transform_9, window_bounds = array<i64: 16, 1>}, {pipeline_mode = #tpu.pipeline_mode<synchronous>, transform_indices = @transform_10, window_bounds = array<i64: 16, 1>}, {pipeline_mode = #tpu.pipeline_mode<synchronous>, transform_indices = @transform_11, window_bounds = array<i64: 16, 16>}, {transform_indices = @transform_12, window_bounds = array<i64: 1, 8, 16>}, {transform_indices = @transform_13, window_bounds = array<i64: 1, 8, 16>}, {transform_indices = @transform_14, window_bounds = array<i64: 8, 128>}]} {
    %c0 = arith.constant 0 : index
    %c0_0 = arith.constant 0 : index
    %c0_1 = arith.constant 0 : index
    %0 = vector.load %arg2[%c0, %c0_0, %c0_1] : memref<1x16x16xf32, #tpu.memory_space<vmem>>, vector<1x16x16xf32>
    %1 = vector.shape_cast %0 : vector<1x16x16xf32> to vector<16x16xf32>
    %c0_2 = arith.constant 0 : index
    %c0_3 = arith.constant 0 : index
    %c0_4 = arith.constant 0 : index
    %2 = vector.load %arg3[%c0_2, %c0_3, %c0_4] : memref<1x8x16xf32, #tpu.memory_space<vmem>>, vector<1x8x16xf32>
    %3 = vector.shape_cast %2 : vector<1x8x16xf32> to vector<8x16xf32>
    %c0_5 = arith.constant 0 : index
    %c0_6 = arith.constant 0 : index
    %4 = vector.load %arg6[%c0_5, %c0_6] : memref<16x1xf32, #tpu.memory_space<vmem>>, vector<16x1xf32>
    %c0_7 = arith.constant 0 : index
    %c0_8 = arith.constant 0 : index
    %5 = vector.load %arg7[%c0_7, %c0_8] : memref<16x1xf32, #tpu.memory_space<vmem>>, vector<16x1xf32>
    %c0_9 = arith.constant 0 : index
    %c0_10 = arith.constant 0 : index
    %6 = vector.load %arg8[%c0_9, %c0_10] : memref<8x16xbf16, #tpu.memory_space<vmem>>, vector<8x16xbf16>
    %c0_11 = arith.constant 0 : index
    %c0_12 = arith.constant 0 : index
    %7 = vector.load %arg9[%c0_11, %c0_12] : memref<8x8xbf16, #tpu.memory_space<vmem>>, vector<8x8xbf16>
    %8 = vector.broadcast %4 : vector<16x1xf32> to vector<16x16xf32>
    %9 = arith.mulf %1, %8 : vector<16x16xf32>
    %10 = vector.broadcast %5 : vector<16x1xf32> to vector<16x16xf32>
    %11 = arith.addf %9, %10 : vector<16x16xf32>
    %cst = arith.constant 0.000000e+00 : f32
    %12 = vector.broadcast %cst : f32 to vector<16x16xf32>
    %13 = arith.maximumf %11, %12 : vector<16x16xf32>
    %14 = arith.mulf %13, %13 : vector<16x16xf32>
    %cst_13 = arith.constant dense<0.000000e+00> : vector<16xf32>
    %15 = vector.multi_reduction <add>, %14, %cst_13 [0] : vector<16x16xf32> to vector<16xf32>
    %16 = vector.shape_cast %15 : vector<16xf32> to vector<1x16xf32>
    %cst_14 = arith.constant 1.000000e-24 : f32
    %17 = vector.broadcast %cst_14 : f32 to vector<1x16xf32>
    %18 = arith.maximumf %16, %17 : vector<1x16xf32>
    %19 = math.rsqrt %18 : vector<1x16xf32>
    %20 = vector.broadcast %19 : vector<1x16xf32> to vector<16x16xf32>
    %21 = arith.mulf %13, %20 : vector<16x16xf32>
    %22 = arith.truncf %21 : vector<16x16xf32> to vector<16x16xbf16>
    %cst_15 = arith.constant dense<0.000000e+00> : vector<8x16xf32>
    %23 = tpu.matmul %6, %22, %cst_15 {dimension_numbers = #tpu.dot_dimension_numbers<[1], [0], [0], [1], [0, 0, 1, 1], [], []>} : vector<8x16xbf16>, vector<16x16xbf16>, vector<8x16xf32> -> vector<8x16xf32>
    %24 = arith.truncf %3 : vector<8x16xf32> to vector<8x16xbf16>
    %cst_16 = arith.constant dense<0.000000e+00> : vector<8x16xf32>
    %25 = tpu.matmul %7, %24, %cst_16 {dimension_numbers = #tpu.dot_dimension_numbers<[1], [0], [0], [1], [0, 0, 1, 1], [], []>} : vector<8x8xbf16>, vector<8x16xbf16>, vector<8x16xf32> -> vector<8x16xf32>
    %26 = arith.addf %23, %25 : vector<8x16xf32>
    %c0_17 = arith.constant 0 : index
    %c0_18 = arith.constant 0 : index
    %c0_19 = arith.constant 0 : index
    %27 = vector.load %arg15[%c0_17, %c0_18, %c0_19] : memref<1x8x16xf32, #tpu.memory_space<vmem>>, vector<1x8x16xf32>
    %28 = vector.shape_cast %27 : vector<1x8x16xf32> to vector<8x16xf32>
    %29 = vector.shape_cast %23 : vector<8x16xf32> to vector<1x8x16xf32>
    tpu.vector_store %arg15[%c0_17, %c0_18, %c0_19], %29 {strides = array<i32>} : memref<1x8x16xf32, #tpu.memory_space<vmem>>, vector<1x8x16xf32>,
    %c0_20 = arith.constant 0 : index
    %c0_21 = arith.constant 0 : index
    %c0_22 = arith.constant 0 : index
    %30 = vector.load %arg14[%c0_20, %c0_21, %c0_22] : memref<1x8x16xf32, #tpu.memory_space<vmem>>, vector<1x8x16xf32>
    %31 = vector.shape_cast %30 : vector<1x8x16xf32> to vector<8x16xf32>
    %32 = vector.shape_cast %26 : vector<8x16xf32> to vector<1x8x16xf32>
    tpu.vector_store %arg14[%c0_20, %c0_21, %c0_22], %32 {strides = array<i32>} : memref<1x8x16xf32, #tpu.memory_space<vmem>>, vector<1x8x16xf32>,
    %c0_23 = arith.constant 0 : index
    %c0_24 = arith.constant 0 : index
    %c0_25 = arith.constant 0 : index
    %33 = vector.load %arg4[%c0_23, %c0_24, %c0_25] : memref<1x8x16xf32, #tpu.memory_space<vmem>>, vector<1x8x16xf32>
    %34 = vector.shape_cast %33 : vector<1x8x16xf32> to vector<8x16xf32>
    %c0_26 = arith.constant 0 : index
    %c0_27 = arith.constant 0 : index
    %35 = vector.load %arg11[%c0_26, %c0_27] : memref<16x1xf32, #tpu.memory_space<vmem>>, vector<16x1xf32>
    %36 = arith.mulf %34, %34 : vector<8x16xf32>
    %cst_28 = arith.constant dense<0.000000e+00> : vector<16xf32>
    %37 = vector.multi_reduction <add>, %36, %cst_28 [0] : vector<8x16xf32> to vector<16xf32>
    %38 = vector.shape_cast %37 : vector<16xf32> to vector<1x16xf32>
    %39 = vector.broadcast %35 : vector<16x1xf32> to vector<16x16xf32>
    %40 = vector.broadcast %38 : vector<1x16xf32> to vector<16x16xf32>
    %41 = arith.addf %39, %40 : vector<16x16xf32>
    %c0_29 = arith.constant 0 : index
    %c0_30 = arith.constant 0 : index
    %42 = vector.load %arg10[%c0_29, %c0_30] : memref<16x8xf32, #tpu.memory_space<vmem>>, vector<16x8xf32>
    %cst_31 = arith.constant dense<0.000000e+00> : vector<16x16xf32>
    %43 = tpu.matmul %42, %34, %cst_31 {dimension_numbers = #tpu.dot_dimension_numbers<[1], [0], [0], [1], [0, 0, 1, 1], [], []>} : vector<16x8xf32>, vector<8x16xf32>, vector<16x16xf32> -> vector<16x16xf32>
    %cst_32 = arith.constant 2.000000e+00 : f32
    %44 = vector.broadcast %cst_32 : f32 to vector<16x16xf32>
    %45 = arith.mulf %44, %43 : vector<16x16xf32>
    %46 = arith.subf %41, %45 : vector<16x16xf32>
    %cst_33 = arith.constant dense<0xFF800000> : vector<16xf32>
    %47 = vector.multi_reduction <maximumf>, %46, %cst_33 [0] : vector<16x16xf32> to vector<16xf32>
    %48 = vector.shape_cast %47 : vector<16xf32> to vector<1x16xf32>
    %c0_34 = arith.constant 0 : index
    %c0_35 = arith.constant 0 : index
    %c0_36 = arith.constant 0 : index
    %49 = vector.load %arg5[%c0_34, %c0_35, %c0_36] : memref<1x16x1xf32, #tpu.memory_space<vmem>>, vector<1x16x1xf32>
    %50 = vector.shape_cast %49 : vector<1x16x1xf32> to vector<16x1xf32>
    %51 = vector.broadcast %48 : vector<1x16xf32> to vector<16x16xf32>
    %52 = arith.subf %51, %46 : vector<16x16xf32>
    %53 = vector.broadcast %50 : vector<16x1xf32> to vector<16x16xf32>
    %54 = arith.mulf %53, %52 : vector<16x16xf32>
    %cst_37 = arith.constant dense<0xFF800000> : vector<16xf32>
    %55 = vector.multi_reduction <maximumf>, %54, %cst_37 [0] : vector<16x16xf32> to vector<16xf32>
    %56 = vector.shape_cast %55 : vector<16xf32> to vector<1x16xf32>
    %57 = tpu.iota {dimensions = array<i32: 0>} : vector<16x16xi32>
    %58 = vector.broadcast %56 : vector<1x16xf32> to vector<16x16xf32>
    %59 = arith.cmpf oeq, %54, %58 : vector<16x16xf32>
    %c16_i32 = arith.constant 16 : i32
    %60 = vector.broadcast %c16_i32 : i32 to vector<16x16xi32>
    %61 = arith.select %59, %57, %60 : vector<16x16xi1>, vector<16x16xi32>
    %cst_38 = arith.constant dense<2147483647> : vector<16xi32>
    %62 = vector.multi_reduction <minsi>, %61, %cst_38 [0] : vector<16x16xi32> to vector<16xi32>
    %63 = vector.shape_cast %62 : vector<16xi32> to vector<1x16xi32>
    %64 = vector.broadcast %63 : vector<1x16xi32> to vector<16x16xi32>
    %65 = arith.cmpi eq, %57, %64 : vector<16x16xi32>
    %66 = arith.extui %65 : vector<16x16xi1> to vector<16x16xi32>
    %67 = arith.sitofp %66 : vector<16x16xi32> to vector<16x16xf32>
    %c0_39 = arith.constant 0 : index
    %c0_40 = arith.constant 0 : index
    %68 = vector.load %arg13[%c0_39, %c0_40] : memref<16x16xf32, #tpu.memory_space<vmem>>, vector<16x16xf32>
    %cst_41 = arith.constant dense<0.000000e+00> : vector<16x16xf32>
    %69 = tpu.matmul %68, %67, %cst_41 {dimension_numbers = #tpu.dot_dimension_numbers<[1], [0], [0], [1], [0, 0, 1, 1], [], []>} : vector<16x16xf32>, vector<16x16xf32>, vector<16x16xf32> -> vector<16x16xf32>
    %c0_42 = arith.constant 0 : index
    %c0_43 = arith.constant 0 : index
    %70 = vector.load %arg12[%c0_42, %c0_43] : memref<16x1xf32, #tpu.memory_space<vmem>>, vector<16x1xf32>
    %71 = vector.broadcast %70 : vector<16x1xf32> to vector<16x16xf32>
    %72 = arith.mulf %71, %67 : vector<16x16xf32>
    %cst_44 = arith.constant dense<0.000000e+00> : vector<16xf32>
    %73 = vector.multi_reduction <add>, %72, %cst_44 [0] : vector<16x16xf32> to vector<16xf32>
    %74 = vector.shape_cast %73 : vector<16xf32> to vector<1x16xf32>
    %cst_45 = arith.constant dense<0xFF800000> : vector<16xf32>
    %75 = vector.multi_reduction <maximumf>, %1, %cst_45 [0] : vector<16x16xf32> to vector<16xf32>
    %76 = vector.shape_cast %75 : vector<16xf32> to vector<1x16xf32>
    %77 = vector.broadcast %76 : vector<1x16xf32> to vector<16x16xf32>
    %78 = arith.subf %1, %77 : vector<16x16xf32>
    %79 = math.exp %78 : vector<16x16xf32>
    %cst_46 = arith.constant dense<0.000000e+00> : vector<16xf32>
    %80 = vector.multi_reduction <add>, %79, %cst_46 [0] : vector<16x16xf32> to vector<16xf32>
    %81 = vector.shape_cast %80 : vector<16xf32> to vector<1x16xf32>
    %82 = math.log %81 : vector<1x16xf32>
    %83 = arith.addf %76, %82 : vector<1x16xf32>
    %84 = vector.broadcast %83 : vector<1x16xf32> to vector<16x16xf32>
    %85 = arith.subf %1, %84 : vector<16x16xf32>
    %86 = arith.mulf %69, %85 : vector<16x16xf32>
    %cst_47 = arith.constant dense<0.000000e+00> : vector<16xf32>
    %87 = vector.multi_reduction <add>, %86, %cst_47 [0] : vector<16x16xf32> to vector<16xf32>
    %88 = vector.shape_cast %87 : vector<16xf32> to vector<1x16xf32>
    %89 = arith.subf %74, %88 : vector<1x16xf32>
    %90 = tpu.iota {dimensions = array<i32: 1>} : vector<1x16xi32>
    %c16_i32_48 = arith.constant 16 : i32
    %91 = arith.muli %arg1, %c16_i32_48 : i32
    %92 = vector.broadcast %91 : i32 to vector<1x16xi32>
    %93 = arith.addi %92, %90 : vector<1x16xi32>
    %c16_i32_49 = arith.constant 16 : i32
    %94 = vector.broadcast %c16_i32_49 : i32 to vector<1x16xi32>
    %95 = arith.cmpi slt, %93, %94 : vector<1x16xi32>
    %cst_50 = arith.constant 0.000000e+00 : f32
    %96 = vector.broadcast %cst_50 : f32 to vector<1x16xf32>
    %97 = arith.select %95, %89, %96 : vector<1x16xi1>, vector<1x16xf32>
    %98 = vector.shape_cast %97 : vector<1x16xf32> to vector<1x1x16xf32>
    %cst_51 = arith.constant dense<0.000000e+00> : vector<1xf32>
    %99 = vector.multi_reduction <add>, %98, %cst_51 [1, 2] : vector<1x1x16xf32> to vector<1xf32>
    %100 = vector.shape_cast %99 : vector<1xf32> to vector<1x1x1xf32>
    %101 = vector.extract %100[0, 0, 0] : f32 from vector<1x1x1xf32>
    %102 = tpu.iota {dimensions = array<i32: 0>} : vector<8x128xi32>
    %103 = tpu.iota {dimensions = array<i32: 1>} : vector<8x128xi32>
    %c0_i32 = arith.constant 0 : i32
    %104 = vector.broadcast %c0_i32 : i32 to vector<8x128xi32>
    %105 = arith.cmpi eq, %102, %104 : vector<8x128xi32>
    %c0_i32_52 = arith.constant 0 : i32
    %106 = vector.broadcast %c0_i32_52 : i32 to vector<8x128xi32>
    %107 = arith.cmpi eq, %103, %106 : vector<8x128xi32>
    %108 = arith.andi %105, %107 : vector<8x128xi1>
    %cst_53 = arith.constant 0.000000e+00 : f32
    %109 = vector.broadcast %101 : f32 to vector<8x128xf32>
    %110 = vector.broadcast %cst_53 : f32 to vector<8x128xf32>
    %111 = arith.select %108, %109, %110 : vector<8x128xi1>, vector<8x128xf32>
    %c0_54 = arith.constant 0 : index
    %c0_55 = arith.constant 0 : index
    %112 = vector.load %arg16[%c0_54, %c0_55] : memref<8x128xf32, #tpu.memory_space<vmem>>, vector<8x128xf32>
    tpu.vector_store %arg16[%c0_54, %c0_55], %111 {strides = array<i32>} : memref<8x128xf32, #tpu.memory_space<vmem>>, vector<8x128xf32>,
    return
  }
  func.func @transform_0(%arg0: i32, %arg1: i32) -> (i32, i32, i32) {
    %c0_i32 = arith.constant 0 : i32
    %c0_i32_0 = arith.constant 0 : i32
    return %arg0, %c0_i32, %arg1 : i32, i32, i32
  }
  func.func @transform_1(%arg0: i32, %arg1: i32) -> (i32, i32, i32) {
    %c0_i32 = arith.constant 0 : i32
    %c0_i32_0 = arith.constant 0 : i32
    return %arg0, %c0_i32, %arg1 : i32, i32, i32
  }
  func.func @transform_2(%arg0: i32, %arg1: i32) -> (i32, i32, i32) {
    %c0_i32 = arith.constant 0 : i32
    %c0_i32_0 = arith.constant 0 : i32
    return %arg0, %c0_i32, %arg1 : i32, i32, i32
  }
  func.func @transform_3(%arg0: i32, %arg1: i32) -> (i32, i32, i32) {
    %c0_i32 = arith.constant 0 : i32
    %c0_i32_0 = arith.constant 0 : i32
    %c0_i32_1 = arith.constant 0 : i32
    return %arg0, %c0_i32, %c0_i32_0 : i32, i32, i32
  }
  func.func @transform_4(%arg0: i32, %arg1: i32) -> (i32, i32) {
    %c0_i32 = arith.constant 0 : i32
    %c0_i32_0 = arith.constant 0 : i32
    %c0_i32_1 = arith.constant 0 : i32
    return %c0_i32, %c0_i32_0 : i32, i32
  }
  func.func @transform_5(%arg0: i32, %arg1: i32) -> (i32, i32) {
    %c0_i32 = arith.constant 0 : i32
    %c0_i32_0 = arith.constant 0 : i32
    %c0_i32_1 = arith.constant 0 : i32
    return %c0_i32, %c0_i32_0 : i32, i32
  }
  func.func @transform_6(%arg0: i32, %arg1: i32) -> (i32, i32) {
    %c0_i32 = arith.constant 0 : i32
    %c0_i32_0 = arith.constant 0 : i32
    %c0_i32_1 = arith.constant 0 : i32
    return %c0_i32, %c0_i32_0 : i32, i32
  }
  func.func @transform_7(%arg0: i32, %arg1: i32) -> (i32, i32) {
    %c0_i32 = arith.constant 0 : i32
    %c0_i32_0 = arith.constant 0 : i32
    %c0_i32_1 = arith.constant 0 : i32
    return %c0_i32, %c0_i32_0 : i32, i32
  }
  func.func @transform_8(%arg0: i32, %arg1: i32) -> (i32, i32) {
    %c0_i32 = arith.constant 0 : i32
    %c0_i32_0 = arith.constant 0 : i32
    %c0_i32_1 = arith.constant 0 : i32
    return %c0_i32, %c0_i32_0 : i32, i32
  }
  func.func @transform_9(%arg0: i32, %arg1: i32) -> (i32, i32) {
    %c0_i32 = arith.constant 0 : i32
    %c0_i32_0 = arith.constant 0 : i32
    %c0_i32_1 = arith.constant 0 : i32
    return %c0_i32, %c0_i32_0 : i32, i32
  }
  func.func @transform_10(%arg0: i32, %arg1: i32) -> (i32, i32) {
    %c0_i32 = arith.constant 0 : i32
    %c0_i32_0 = arith.constant 0 : i32
    %c0_i32_1 = arith.constant 0 : i32
    return %c0_i32, %c0_i32_0 : i32, i32
  }
  func.func @transform_11(%arg0: i32, %arg1: i32) -> (i32, i32) {
    %c0_i32 = arith.constant 0 : i32
    %c0_i32_0 = arith.constant 0 : i32
    %c0_i32_1 = arith.constant 0 : i32
    return %c0_i32, %c0_i32_0 : i32, i32
  }
  func.func @transform_12(%arg0: i32, %arg1: i32) -> (i32, i32, i32) {
    %c0_i32 = arith.constant 0 : i32
    %c0_i32_0 = arith.constant 0 : i32
    return %arg0, %c0_i32, %arg1 : i32, i32, i32
  }
  func.func @transform_13(%arg0: i32, %arg1: i32) -> (i32, i32, i32) {
    %c0_i32 = arith.constant 0 : i32
    %c0_i32_0 = arith.constant 0 : i32
    return %arg0, %c0_i32, %arg1 : i32, i32, i32
  }
  func.func @transform_14(%arg0: i32, %arg1: i32) -> (i32, i32) {
    %c1_i32 = arith.constant 1 : i32
    %0 = arith.muli %arg0, %c1_i32 : i32
    %1 = arith.addi %0, %arg1 : i32
    %c0_i32 = arith.constant 0 : i32
    %c0_i32_0 = arith.constant 0 : i32
    return %1, %c0_i32 : i32, i32
  }
}

</mosaic_0001>

<llo_original>
// kernel: neg.4
$region0: #{neg.4}
  #allocation0 [shape = 's32[1]{0}', space=sflag, size = 0x4, scoped, tag = 'scoped memory for neg.4']
  %s0 = inlined_call_operand.vmem [shape: f32[8], index: 0, kind: input, shape index: {}]
  %s1 = inlined_call_operand.vmem [shape: f32[8], index: 1, kind: output, shape index: {}]
  %v2 = vld [vmem:[%s0] sm:$0x1]
  %3 = xla_tuple %v2
  %4 = xla_tuple %3
  %v5 = vxor.u32 %v2, 2147483648
  %6 = xla_tuple %v5
  %7 = vst [vmem:[%s1] sm:$0x1] %v5

// kernel: _forward_impl.1
$region0: #{_forward_impl.1}
  #allocation0 [shape = 'u32[]', space=smem, size = 0x4, offset = 0x4, fixed_abs, tag = 'smem constant byte address 0x4 - core index']
  #allocation1 [shape = 'u32[144,128]{1,0:T(1,128)}', space=vmem, size = 0x12000, scoped, tag = 'internal scratch']
  %s0 = inlined_call_operand.vmem [shape: f32[2,16,16], index: 0, kind: input, shape index: {}]
  %s1 = inlined_call_operand.vmem [shape: f32[2,8,16], index: 1, kind: input, shape index: {}]
  %s2 = inlined_call_operand.vmem [shape: f32[2,8,16], index: 2, kind: input, shape index: {}]
  %s3 = inlined_call_operand.vmem [shape: f32[2,16,1], index: 3, kind: input, shape index: {}]
  %s4 = inlined_call_operand.vmem [shape: f32[16,1], index: 4, kind: input, shape index: {}]
  %s5 = inlined_call_operand.vmem [shape: f32[16,1], index: 5, kind: input, shape index: {}]
  %s6 = inlined_call_operand.vmem [shape: bf16[8,16], index: 6, kind: input, shape index: {}]
  %s7 = inlined_call_operand.vmem [shape: bf16[8,8], index: 7, kind: input, shape index: {}]
  %s8 = inlined_call_operand.vmem [shape: f32[16,8], index: 8, kind: input, shape index: {}]
  %s9 = inlined_call_operand.vmem [shape: f32[16,1], index: 9, kind: input, shape index: {}]
  %s10 = inlined_call_operand.vmem [shape: f32[16,1], index: 10, kind: input, shape index: {}]
  %s11 = inlined_call_operand.vmem [shape: f32[16,16], index: 11, kind: input, shape index: {}]
  %s12 = inlined_call_operand.vmem [shape: f32[2,8,16], index: 12, kind: output, shape index: {0}]
  %s13 = inlined_call_operand.vmem [shape: f32[2,8,16], index: 13, kind: output, shape index: {1}]
  %s14 = inlined_call_operand.vmem [shape: f32[16,128], index: 14, kind: output, shape index: {2}]
  %15 = xla_tuple %s12, %s13, %s14
  %s16 = sld [smem:[#allocation0]]
  $region97: #{_forward_impl.1} parent=0
    _
  %s18 = ssub.s32 1, %s16
  %s19 = scalar_select 0, %s18, %s16
  loop: start=0, step=1, limit=4
  $region2: #{_forward_impl.1} parent=0 // loop_pre_header
    _
  $region3: #{_forward_impl.1} parent=0 // loop_header
    %s21 = sphi 0, %s25
    %p22 = scmp.ge.s32.totalorder %s21, 4
    %s28 = sphi 0, %s40
    %s29 = sphi 0, %s36
    %s30 = sphi 0, %s28
    %s31 = sphi 0, %s29
    %s32 = sphi 0, %s30
    %s33 = sphi 0, %s31
    %s45 = sphi 0, %s47
    %s48 = sphi 0, %s45
    %s49 = sphi 0, %s48
    %s65 = sphi 0, %s49
    %s73 = sphi 0, %s75
    %s76 = sphi 0, %s73
    %s77 = sphi 0, %s76
    %s93 = sphi 0, %s77
    %s101 = sphi 0, %s103
    %s104 = sphi 0, %s101
    %s105 = sphi 0, %s104
    %s121 = sphi 0, %s105
    %s127 = sphi 0, %s129
    %s130 = sphi 0, %s127
    %s131 = sphi 0, %s130
    %s147 = sphi 0, %s131
    %s151 = sphi 0, %s151
    %s153 = sphi 0, %s151
    %s154 = sphi 0, %s153
    %s168 = sphi 0, %s154
    %s172 = sphi 0, %s172
    %s174 = sphi 0, %s172
    %s175 = sphi 0, %s174
    %s189 = sphi 0, %s175
    %s193 = sphi 0, %s193
    %s195 = sphi 0, %s193
    %s196 = sphi 0, %s195
    %s210 = sphi 0, %s196
    %s214 = sphi 0, %s214
    %s216 = sphi 0, %s214
    %s217 = sphi 0, %s216
    %s231 = sphi 0, %s217
    %s235 = sphi 0, %s235
    %s237 = sphi 0, %s235
    %s238 = sphi 0, %s237
    %s252 = sphi 0, %s238
    %s256 = sphi 0, %s256
    %s258 = sphi 0, %s256
    %s259 = sphi 0, %s258
    %s273 = sphi 0, %s259
    %s277 = sphi 0, %s277
    %s279 = sphi 0, %s277
    %s280 = sphi 0, %s279
    %s294 = sphi 0, %s280
    %s298 = sphi 0, %s298
    %s300 = sphi 0, %s298
    %s301 = sphi 0, %s300
    %s315 = sphi 0, %s301
    %s323 = sphi 0, %s325
    %s326 = sphi 0, %s323
    %s327 = sphi 0, %s326
    %s343 = sphi 0, %s327
    %s351 = sphi 0, %s353
    %s354 = sphi 0, %s351
    %s355 = sphi 0, %s354
    %s371 = sphi 0, %s355
    %s379 = sphi 0, %s381
    %s382 = sphi 0, %s379
    %s383 = sphi 0, %s382
    %s399 = sphi 0, %s383
  $region4: #{_forward_impl.1} parent=0 // loop_header_branch
    %24 = sbr.rel (%p22) target = $region8
  $region5: #{_forward_impl.1} parent=0 // loop_body
    %s26 = ssub.s32 %s21, 1
    %s27 = ssub.s32 %s21, 2
    %s34 = sadd.s32 1, %s29
    %p35 = scmp.ge.s32.totalorder %s34, 1
    %s36 = scalar_select %p35, 0, %s34
    %s37 = sadd.s32 1, %s28
    %s38 = scalar_select %p35, %s37, %s28
    %p39 = scmp.ge.s32.totalorder %s38, 2
    %s40 = scalar_select %p39, 0, %s38
    %s41 = ssub.s32 %s28, %s40
    %s42 = ssub.s32 %s29, %s36
    %s43 = sor.u32 %s41, %s42
    %p44 = scmp.eq.s32.totalorder %s43, 0
    %s46 = sadd.s32 %s45, 1
    %s47 = scalar_select %p44, %s45, %s46
    %p50 = pneg %p44
    %p51 = scmp.eq.s32.totalorder %s21, 1
    %p52 = por %p50, %p51
    %p53 = scmp.ne.s32.totalorder %s45, %s48
    %p54 = scmp.eq.s32.totalorder %s21, 0
    %p55 = por %p53, %p54
    %p56 = scmp.ne.s32.totalorder %s45, %s48
    %p57 = scmp.eq.s32.totalorder %s26, 1
    %p58 = por %p56, %p57
    %p59 = scmp.ne.s32.totalorder %s48, %s49
    %p60 = scmp.eq.s32.totalorder %s26, 0
    %p61 = por %p59, %p60
    %p62 = scmp.ne.s32.totalorder %s48, %s49
    %p63 = scmp.eq.s32.totalorder %s27, 1
    %p64 = por %p62, %p63
    %p66 = scmp.ne.s32.totalorder %s49, %s65
    %p67 = scmp.eq.s32.totalorder %s27, 0
    %p68 = por %p66, %p67
    %s69 = ssub.s32 %s28, %s40
    %s70 = ssub.s32 %s29, %s36
    %s71 = sor.u32 %s69, %s70
    %p72 = scmp.eq.s32.totalorder %s71, 0
    %s74 = sadd.s32 %s73, 1
    %s75 = scalar_select %p72, %s73, %s74
    %p78 = pneg %p72
    %p79 = scmp.eq.s32.totalorder %s21, 1
    %p80 = por %p78, %p79
    %p81 = scmp.ne.s32.totalorder %s73, %s76
    %p82 = scmp.eq.s32.totalorder %s21, 0
    %p83 = por %p81, %p82
    %p84 = scmp.ne.s32.totalorder %s73, %s76
    %p85 = scmp.eq.s32.totalorder %s26, 1
    %p86 = por %p84, %p85
    %p87 = scmp.ne.s32.totalorder %s76, %s77
    %p88 = scmp.eq.s32.totalorder %s26, 0
    %p89 = por %p87, %p88
    %p90 = scmp.ne.s32.totalorder %s76, %s77
    %p91 = scmp.eq.s32.totalorder %s27, 1
    %p92 = por %p90, %p91
    %p94 = scmp.ne.s32.totalorder %s77, %s93
    %p95 = scmp.eq.s32.totalorder %s27, 0
    %p96 = por %p94, %p95
    %s97 = ssub.s32 %s28, %s40
    %s98 = ssub.s32 %s29, %s36
    %s99 = sor.u32 %s97, %s98
    %p100 = scmp.eq.s32.totalorder %s99, 0
    %s102 = sadd.s32 %s101, 1
    %s103 = scalar_select %p100, %s101, %s102
    %p106 = pneg %p100
    %p107 = scmp.eq.s32.totalorder %s21, 1
    %p108 = por %p106, %p107
    %p109 = scmp.ne.s32.totalorder %s101, %s104
    %p110 = scmp.eq.s32.totalorder %s21, 0
    %p111 = por %p109, %p110
    %p112 = scmp.ne.s32.totalorder %s101, %s104
    %p113 = scmp.eq.s32.totalorder %s26, 1
    %p114 = por %p112, %p113
    %p115 = scmp.ne.s32.totalorder %s104, %s105
    %p116 = scmp.eq.s32.totalorder %s26, 0
    %p117 = por %p115, %p116
    %p118 = scmp.ne.s32.totalorder %s104, %s105
    %p119 = scmp.eq.s32.totalorder %s27, 1
    %p120 = por %p118, %p119
    %p122 = scmp.ne.s32.totalorder %s105, %s121
    %p123 = scmp.eq.s32.totalorder %s27, 0
    %p124 = por %p122, %p123
    %s125 = ssub.s32 %s28, %s40
    %p126 = scmp.eq.s32.totalorder %s125, 0
    %s128 = sadd.s32 %s127, 1
    %s129 = scalar_select %p126, %s127, %s128
    %p132 = pneg %p126
    %p133 = scmp.eq.s32.totalorder %s21, 1
    %p134 = por %p132, %p133
    %p135 = scmp.ne.s32.totalorder %s127, %s130
    %p136 = scmp.eq.s32.totalorder %s21, 0
    %p137 = por %p135, %p136
    %p138 = scmp.ne.s32.totalorder %s127, %s130
    %p139 = scmp.eq.s32.totalorder %s26, 1
    %p140 = por %p138, %p139
    %p141 = scmp.ne.s32.totalorder %s130, %s131
    %p142 = scmp.eq.s32.totalorder %s26, 0
    %p143 = por %p141, %p142
    %p144 = scmp.ne.s32.totalorder %s130, %s131
    %p145 = scmp.eq.s32.totalorder %s27, 1
    %p146 = por %p144, %p145
    %p148 = scmp.ne.s32.totalorder %s131, %s147
    %p149 = scmp.eq.s32.totalorder %s27, 0
    %p150 = por %p148, %p149
    %s152 = sadd.s32 %s151, 1
    %p155 = scmp.eq.s32.totalorder %s21, 1
    %p156 = scmp.ne.s32.totalorder %s151, %s153
    %p157 = scmp.eq.s32.totalorder %s21, 0
    %p158 = por %p156, %p157
    %p159 = scmp.ne.s32.totalorder %s151, %s153
    %p160 = scmp.eq.s32.totalorder %s26, 1
    %p161 = por %p159, %p160
    %p162 = scmp.ne.s32.totalorder %s153, %s154
    %p163 = scmp.eq.s32.totalorder %s26, 0
    %p164 = por %p162, %p163
    %p165 = scmp.ne.s32.totalorder %s153, %s154
    %p166 = scmp.eq.s32.totalorder %s27, 1
    %p167 = por %p165, %p166
    %p169 = scmp.ne.s32.totalorder %s154, %s168
    %p170 = scmp.eq.s32.totalorder %s27, 0
    %p171 = por %p169, %p170
    %s173 = sadd.s32 %s172, 1
    %p176 = scmp.eq.s32.totalorder %s21, 1
    %p177 = scmp.ne.s32.totalorder %s172, %s174
    %p178 = scmp.eq.s32.totalorder %s21, 0
    %p179 = por %p177, %p178
    %p180 = scmp.ne.s32.totalorder %s172, %s174
    %p181 = scmp.eq.s32.totalorder %s26, 1
    %p182 = por %p180, %p181
    %p183 = scmp.ne.s32.totalorder %s174, %s175
    %p184 = scmp.eq.s32.totalorder %s26, 0
    %p185 = por %p183, %p184
    %p186 = scmp.ne.s32.totalorder %s174, %s175
    %p187 = scmp.eq.s32.totalorder %s27, 1
    %p188 = por %p186, %p187
    %p190 = scmp.ne.s32.totalorder %s175, %s189
    %p191 = scmp.eq.s32.totalorder %s27, 0
    %p192 = por %p190, %p191
    %s194 = sadd.s32 %s193, 1
    %p197 = scmp.eq.s32.totalorder %s21, 1
    %p198 = scmp.ne.s32.totalorder %s193, %s195
    %p199 = scmp.eq.s32.totalorder %s21, 0
    %p200 = por %p198, %p199
    %p201 = scmp.ne.s32.totalorder %s193, %s195
    %p202 = scmp.eq.s32.totalorder %s26, 1
    %p203 = por %p201, %p202
    %p204 = scmp.ne.s32.totalorder %s195, %s196
    %p205 = scmp.eq.s32.totalorder %s26, 0
    %p206 = por %p204, %p205
    %p207 = scmp.ne.s32.totalorder %s195, %s196
    %p208 = scmp.eq.s32.totalorder %s27, 1
    %p209 = por %p207, %p208
    %p211 = scmp.ne.s32.totalorder %s196, %s210
    %p212 = scmp.eq.s32.totalorder %s27, 0
    %p213 = por %p211, %p212
    %s215 = sadd.s32 %s214, 1
    %p218 = scmp.eq.s32.totalorder %s21, 1
    %p219 = scmp.ne.s32.totalorder %s214, %s216
    %p220 = scmp.eq.s32.totalorder %s21, 0
    %p221 = por %p219, %p220
    %p222 = scmp.ne.s32.totalorder %s214, %s216
    %p223 = scmp.eq.s32.totalorder %s26, 1
    %p224 = por %p222, %p223
    %p225 = scmp.ne.s32.totalorder %s216, %s217
    %p226 = scmp.eq.s32.totalorder %s26, 0
    %p227 = por %p225, %p226
    %p228 = scmp.ne.s32.totalorder %s216, %s217
    %p229 = scmp.eq.s32.totalorder %s27, 1
    %p230 = por %p228, %p229
    %p232 = scmp.ne.s32.totalorder %s217, %s231
    %p233 = scmp.eq.s32.totalorder %s27, 0
    %p234 = por %p232, %p233
    %s236 = sadd.s32 %s235, 1
    %p239 = scmp.eq.s32.totalorder %s21, 1
    %p240 = scmp.ne.s32.totalorder %s235, %s237
    %p241 = scmp.eq.s32.totalorder %s21, 0
    %p242 = por %p240, %p241
    %p243 = scmp.ne.s32.totalorder %s235, %s237
    %p244 = scmp.eq.s32.totalorder %s26, 1
    %p245 = por %p243, %p244
    %p246 = scmp.ne.s32.totalorder %s237, %s238
    %p247 = scmp.eq.s32.totalorder %s26, 0
    %p248 = por %p246, %p247
    %p249 = scmp.ne.s32.totalorder %s237, %s238
    %p250 = scmp.eq.s32.totalorder %s27, 1
    %p251 = por %p249, %p250
    %p253 = scmp.ne.s32.totalorder %s238, %s252
    %p254 = scmp.eq.s32.totalorder %s27, 0
    %p255 = por %p253, %p254
    %s257 = sadd.s32 %s256, 1
    %p260 = scmp.eq.s32.totalorder %s21, 1
    %p261 = scmp.ne.s32.totalorder %s256, %s258
    %p262 = scmp.eq.s32.totalorder %s21, 0
    %p263 = por %p261, %p262
    %p264 = scmp.ne.s32.totalorder %s256, %s258
    %p265 = scmp.eq.s32.totalorder %s26, 1
    %p266 = por %p264, %p265
    %p267 = scmp.ne.s32.totalorder %s258, %s259
    %p268 = scmp.eq.s32.totalorder %s26, 0
    %p269 = por %p267, %p268
    %p270 = scmp.ne.s32.totalorder %s258, %s259
    %p271 = scmp.eq.s32.totalorder %s27, 1
    %p272 = por %p270, %p271
    %p274 = scmp.ne.s32.totalorder %s259, %s273
    %p275 = scmp.eq.s32.totalorder %s27, 0
    %p276 = por %p274, %p275
    %s278 = sadd.s32 %s277, 1
    %p281 = scmp.eq.s32.totalorder %s21, 1
    %p282 = scmp.ne.s32.totalorder %s277, %s279
    %p283 = scmp.eq.s32.totalorder %s21, 0
    %p284 = por %p282, %p283
    %p285 = scmp.ne.s32.totalorder %s277, %s279
    %p286 = scmp.eq.s32.totalorder %s26, 1
    %p287 = por %p285, %p286
    %p288 = scmp.ne.s32.totalorder %s279, %s280
    %p289 = scmp.eq.s32.totalorder %s26, 0
    %p290 = por %p288, %p289
    %p291 = scmp.ne.s32.totalorder %s279, %s280
    %p292 = scmp.eq.s32.totalorder %s27, 1
    %p293 = por %p291, %p292
    %p295 = scmp.ne.s32.totalorder %s280, %s294
    %p296 = scmp.eq.s32.totalorder %s27, 0
    %p297 = por %p295, %p296
    %s299 = sadd.s32 %s298, 1
    %p302 = scmp.eq.s32.totalorder %s21, 1
    %p303 = scmp.ne.s32.totalorder %s298, %s300
    %p304 = scmp.eq.s32.totalorder %s21, 0
    %p305 = por %p303, %p304
    %p306 = scmp.ne.s32.totalorder %s298, %s300
    %p307 = scmp.eq.s32.totalorder %s26, 1
    %p308 = por %p306, %p307
    %p309 = scmp.ne.s32.totalorder %s300, %s301
    %p310 = scmp.eq.s32.totalorder %s26, 0
    %p311 = por %p309, %p310
    %p312 = scmp.ne.s32.totalorder %s300, %s301
    %p313 = scmp.eq.s32.totalorder %s27, 1
    %p314 = por %p312, %p313
    %p316 = scmp.ne.s32.totalorder %s301, %s315
    %p317 = scmp.eq.s32.totalorder %s27, 0
    %p318 = por %p316, %p317
    %s319 = ssub.s32 %s28, %s40
    %s320 = ssub.s32 %s29, %s36
    %s321 = sor.u32 %s319, %s320
    %p322 = scmp.eq.s32.totalorder %s321, 0
    %s324 = sadd.s32 %s323, 1
    %s325 = scalar_select %p322, %s323, %s324
    %p328 = pneg %p322
    %p329 = scmp.eq.s32.totalorder %s21, 1
    %p330 = por %p328, %p329
    %p331 = scmp.ne.s32.totalorder %s323, %s326
    %p332 = scmp.eq.s32.totalorder %s21, 0
    %p333 = por %p331, %p332
    %p334 = scmp.ne.s32.totalorder %s323, %s326
    %p335 = scmp.eq.s32.totalorder %s26, 1
    %p336 = por %p334, %p335
    %p337 = scmp.ne.s32.totalorder %s326, %s327
    %p338 = scmp.eq.s32.totalorder %s26, 0
    %p339 = por %p337, %p338
    %p340 = scmp.ne.s32.totalorder %s326, %s327
    %p341 = scmp.eq.s32.totalorder %s27, 1
    %p342 = por %p340, %p341
    %p344 = scmp.ne.s32.totalorder %s327, %s343
    %p345 = scmp.eq.s32.totalorder %s27, 0
    %p346 = por %p344, %p345
    %s347 = ssub.s32 %s28, %s40
    %s348 = ssub.s32 %s29, %s36
    %s349 = sor.u32 %s347, %s348
    %p350 = scmp.eq.s32.totalorder %s349, 0
    %s352 = sadd.s32 %s351, 1
    %s353 = scalar_select %p350, %s351, %s352
    %p356 = pneg %p350
    %p357 = scmp.eq.s32.totalorder %s21, 1
    %p358 = por %p356, %p357
    %p359 = scmp.ne.s32.totalorder %s351, %s354
    %p360 = scmp.eq.s32.totalorder %s21, 0
    %p361 = por %p359, %p360
    %p362 = scmp.ne.s32.totalorder %s351, %s354
    %p363 = scmp.eq.s32.totalorder %s26, 1
    %p364 = por %p362, %p363
    %p365 = scmp.ne.s32.totalorder %s354, %s355
    %p366 = scmp.eq.s32.totalorder %s26, 0
    %p367 = por %p365, %p366
    %p368 = scmp.ne.s32.totalorder %s354, %s355
    %p369 = scmp.eq.s32.totalorder %s27, 1
    %p370 = por %p368, %p369
    %p372 = scmp.ne.s32.totalorder %s355, %s371
    %p373 = scmp.eq.s32.totalorder %s27, 0
    %p374 = por %p372, %p373
    %s375 = sadd.s32 %s28, %s29
    %s376 = sadd.s32 %s40, %s36
    %s377 = ssub.s32 %s375, %s376
    %p378 = scmp.eq.s32.totalorder %s377, 0
    %s380 = sadd.s32 %s379, 1
    %s381 = scalar_select %p378, %s379, %s380
    %p384 = pneg %p378
    %p385 = scmp.eq.s32.totalorder %s21, 1
    %p386 = por %p384, %p385
    %p387 = scmp.ne.s32.totalorder %s379, %s382
    %p388 = scmp.eq.s32.totalorder %s21, 0
    %p389 = por %p387, %p388
    %p390 = scmp.ne.s32.totalorder %s379, %s382
    %p391 = scmp.eq.s32.totalorder %s26, 1
    %p392 = por %p390, %p391
    %p393 = scmp.ne.s32.totalorder %s382, %s383
    %p394 = scmp.eq.s32.totalorder %s26, 0
    %p395 = por %p393, %p394
    %p396 = scmp.ne.s32.totalorder %s382, %s383
    %p397 = scmp.eq.s32.totalorder %s27, 1
    %p398 = por %p396, %p397
    %p400 = scmp.ne.s32.totalorder %s383, %s399
    %p401 = scmp.eq.s32.totalorder %s27, 0
    %p402 = por %p400, %p401
    %p403 = scmp.le.s32.totalorder 1, %s21
    %p404 = scmp.lt.s32.totalorder %s21, 3
    %p405 = pnand %p403, %p404
    %p406 = pneg %p405
    // Predicated region
    $region9: #{_forward_impl.1} parent=5 // pred_check
      _
    $region10: #{_forward_impl.1} parent=5 // pred_check_branch
      %408 = sbr.rel (%p405) target = $region12
    $region11: #{_forward_impl.1} parent=5 // pred_region
      %s409 = ssub.s32 %s21, 1
      // Predicated region
      $region13: #{_forward_impl.1} parent=11 // pred_check
        %p410 = pneg %p164
      $region14: #{_forward_impl.1} parent=11 // pred_check_branch
        %412 = sbr.rel (%p410) target = $region16
      $region15: #{_forward_impl.1} parent=11 // pred_region
        _
      $region16: #{_forward_impl.1} parent=11 // pred_fallthru
        _
      // Predicated region
      $region17: #{_forward_impl.1} parent=11 // pred_check
        %p413 = pneg %p185
      $region18: #{_forward_impl.1} parent=11 // pred_check_branch
        %415 = sbr.rel (%p413) target = $region20
      $region19: #{_forward_impl.1} parent=11 // pred_region
        _
      $region20: #{_forward_impl.1} parent=11 // pred_fallthru
        _
      // Predicated region
      $region21: #{_forward_impl.1} parent=11 // pred_check
        %p416 = pneg %p206
      $region22: #{_forward_impl.1} parent=11 // pred_check_branch
        %418 = sbr.rel (%p416) target = $region24
      $region23: #{_forward_impl.1} parent=11 // pred_region
        _
      $region24: #{_forward_impl.1} parent=11 // pred_fallthru
        _
      // Predicated region
      $region25: #{_forward_impl.1} parent=11 // pred_check
        %p419 = pneg %p227
      $region26: #{_forward_impl.1} parent=11 // pred_check_branch
        %421 = sbr.rel (%p419) target = $region28
      $region27: #{_forward_impl.1} parent=11 // pred_region
        _
      $region28: #{_forward_impl.1} parent=11 // pred_fallthru
        _
      // Predicated region
      $region29: #{_forward_impl.1} parent=11 // pred_check
        %p422 = pneg %p248
      $region30: #{_forward_impl.1} parent=11 // pred_check_branch
        %424 = sbr.rel (%p422) target = $region32
      $region31: #{_forward_impl.1} parent=11 // pred_region
        _
      $region32: #{_forward_impl.1} parent=11 // pred_fallthru
        _
      // Predicated region
      $region33: #{_forward_impl.1} parent=11 // pred_check
        %p425 = pneg %p269
      $region34: #{_forward_impl.1} parent=11 // pred_check_branch
        %427 = sbr.rel (%p425) target = $region36
      $region35: #{_forward_impl.1} parent=11 // pred_region
        _
      $region36: #{_forward_impl.1} parent=11 // pred_fallthru
        _
      // Predicated region
      $region37: #{_forward_impl.1} parent=11 // pred_check
        %p428 = pneg %p290
      $region38: #{_forward_impl.1} parent=11 // pred_check_branch
        %430 = sbr.rel (%p428) target = $region40
      $region39: #{_forward_impl.1} parent=11 // pred_region
        _
      $region40: #{_forward_impl.1} parent=11 // pred_fallthru
        _
      // Predicated region
      $region41: #{_forward_impl.1} parent=11 // pred_check
        %p431 = pneg %p311
      $region42: #{_forward_impl.1} parent=11 // pred_check_branch
        %433 = sbr.rel (%p431) target = $region44
      $region43: #{_forward_impl.1} parent=11 // pred_region
        _
      $region44: #{_forward_impl.1} parent=11 // pred_fallthru
        _
    $region12: #{_forward_impl.1} parent=5 // pred_fallthru
      _
    %p434 = scmp.lt.s32.totalorder %s21, 2
    // Predicated region
    $region45: #{_forward_impl.1} parent=5 // pred_check
      %p435 = pneg %p434
    $region46: #{_forward_impl.1} parent=5 // pred_check_branch
      %437 = sbr.rel (%p435) target = $region48
    $region47: #{_forward_impl.1} parent=5 // pred_region
      // Predicated region
      $region49: #{_forward_impl.1} parent=47 // pred_check
        %p438 = pneg %p55
      $region50: #{_forward_impl.1} parent=47 // pred_check_branch
        %440 = sbr.rel (%p438) target = $region52
      $region51: #{_forward_impl.1} parent=47 // pred_region
        %p441 = scmp.lt.s32.totalorder %s28, 1
        %s442 = scalar_select %p441, %s28, 1
        %p443 = scmp.lt.s32.totalorder %s29, 0
        %s444 = scalar_select %p443, %s29, 0
        %s445 = smul.addr %s442, 2
        %s446 = sadd.s32 %s444, %s445
        %s447 = smul.addr %s446, 8
        %s448 = scalar_lea.vmem %s0, %s447
      $region52: #{_forward_impl.1} parent=47 // pred_fallthru
        _
      // Predicated region
      $region53: #{_forward_impl.1} parent=47 // pred_check
        %p449 = pneg %p83
      $region54: #{_forward_impl.1} parent=47 // pred_check_branch
        %451 = sbr.rel (%p449) target = $region56
      $region55: #{_forward_impl.1} parent=47 // pred_region
        %p452 = scmp.lt.s32.totalorder %s28, 1
        %s453 = scalar_select %p452, %s28, 1
        %p454 = scmp.lt.s32.totalorder %s29, 0
        %s455 = scalar_select %p454, %s29, 0
        %s456 = sadd.s32 %s455, %s453
        %s457 = smul.addr %s456, 8
        %s458 = scalar_lea.vmem %s1, %s457
      $region56: #{_forward_impl.1} parent=47 // pred_fallthru
        _
      // Predicated region
      $region57: #{_forward_impl.1} parent=47 // pred_check
        %p459 = pneg %p111
      $region58: #{_forward_impl.1} parent=47 // pred_check_branch
        %461 = sbr.rel (%p459) target = $region60
      $region59: #{_forward_impl.1} parent=47 // pred_region
        %p462 = scmp.lt.s32.totalorder %s28, 1
        %s463 = scalar_select %p462, %s28, 1
        %p464 = scmp.lt.s32.totalorder %s29, 0
        %s465 = scalar_select %p464, %s29, 0
        %s466 = sadd.s32 %s465, %s463
        %s467 = smul.addr %s466, 8
        %s468 = scalar_lea.vmem %s2, %s467
      $region60: #{_forward_impl.1} parent=47 // pred_fallthru
        _
      // Predicated region
      $region61: #{_forward_impl.1} parent=47 // pred_check
        %p469 = pneg %p137
      $region62: #{_forward_impl.1} parent=47 // pred_check_branch
        %471 = sbr.rel (%p469) target = $region64
      $region63: #{_forward_impl.1} parent=47 // pred_region
        %p472 = scmp.lt.s32.totalorder %s28, 1
        %s473 = scalar_select %p472, %s28, 1
        %s474 = smul.addr %s473, 2
        %s475 = smul.addr %s474, 8
        %s476 = scalar_lea.vmem %s3, %s475
      $region64: #{_forward_impl.1} parent=47 // pred_fallthru
        _
    $region48: #{_forward_impl.1} parent=5 // pred_fallthru
      _
    %p477 = scmp.le.s32.totalorder 1, %s21
    %p478 = scmp.lt.s32.totalorder %s21, 3
    %p479 = pnand %p477, %p478
    %p480 = pneg %p479
    // Predicated region
    $region65: #{_forward_impl.1} parent=5 // pred_check
      _
    $region66: #{_forward_impl.1} parent=5 // pred_check_branch
      %482 = sbr.rel (%p479) target = $region68
    $region67: #{_forward_impl.1} parent=5 // pred_region
      %s483 = ssub.s32 %s21, 1
      %p484 = scmp.lt.s32.totalorder %s30, 1
      %s485 = scalar_select %p484, %s30, 1
      %p486 = scmp.lt.s32.totalorder %s31, 0
      %s487 = scalar_select %p486, %s31, 0
      %s488 = smul.addr %s485, 2
      %s489 = sadd.s32 %s487, %s488
      %s490 = smul.addr %s489, 8
      %s491 = scalar_lea.vmem %s0, %s490
      %p492 = pneg %p61
      %p493 = pneg %p58
      %p494 = scmp.lt.s32.totalorder %s30, 1
      %s495 = scalar_select %p494, %s30, 1
      %p496 = scmp.lt.s32.totalorder %s31, 0
      %s497 = scalar_select %p496, %s31, 0
      %s498 = sadd.s32 %s497, %s495
      %s499 = smul.addr %s498, 8
      %s500 = scalar_lea.vmem %s1, %s499
      %p501 = pneg %p89
      %p502 = pneg %p86
      %p503 = scmp.lt.s32.totalorder %s30, 1
      %s504 = scalar_select %p503, %s30, 1
      %p505 = scmp.lt.s32.totalorder %s31, 0
      %s506 = scalar_select %p505, %s31, 0
      %s507 = sadd.s32 %s506, %s504
      %s508 = smul.addr %s507, 8
      %s509 = scalar_lea.vmem %s2, %s508
      %p510 = pneg %p117
      %p511 = pneg %p114
      %p512 = scmp.lt.s32.totalorder %s30, 1
      %s513 = scalar_select %p512, %s30, 1
      %s514 = smul.addr %s513, 2
      %s515 = smul.addr %s514, 8
      %s516 = scalar_lea.vmem %s3, %s515
      %p517 = pneg %p143
      %p518 = pneg %p140
      %p519 = pneg %p164
      %p520 = pneg %p161
      %p521 = pneg %p185
      %p522 = pneg %p182
      %p523 = pneg %p206
      %p524 = pneg %p203
      %p525 = pneg %p227
      %p526 = pneg %p224
      %p527 = pneg %p248
      %p528 = pneg %p245
      %p529 = pneg %p269
      %p530 = pneg %p266
      %p531 = pneg %p290
      %p532 = pneg %p287
      %p533 = pneg %p311
      %p534 = pneg %p308
      %p535 = pneg %p339
      %p536 = pneg %p336
      %p537 = scmp.lt.s32.totalorder %s30, 1
      %s538 = scalar_select %p537, %s30, 1
      %p539 = scmp.lt.s32.totalorder %s31, 0
      %s540 = scalar_select %p539, %s31, 0
      %s541 = sadd.s32 %s540, %s538
      %s542 = smul.addr %s541, 8
      %s543 = scalar_lea.vmem %s12, %s542
      %p544 = pneg %p367
      %p545 = pneg %p364
      %p546 = scmp.lt.s32.totalorder %s30, 1
      %s547 = scalar_select %p546, %s30, 1
      %p548 = scmp.lt.s32.totalorder %s31, 0
      %s549 = scalar_select %p548, %s31, 0
      %s550 = sadd.s32 %s549, %s547
      %s551 = smul.addr %s550, 8
      %s552 = scalar_lea.vmem %s13, %s551
      %p553 = pneg %p395
      %p554 = pneg %p392
      %s555 = sadd.s32 %s30, %s31
      %p556 = scmp.lt.s32.totalorder %s555, 1
      %s557 = scalar_select %p556, %s555, 1
      %s558 = smul.addr %s557, 8
      %s559 = scalar_lea.vmem %s14, %s558
      %p560 = scmp.lt.s32.totalorder %s30, 1
      %s561 = scalar_select %p560, %s30, 1
      %p562 = scmp.lt.s32.totalorder %s31, 0
      %s563 = scalar_select %p562, %s31, 0
      %s564 = smul.addr %s561, 2
      %s565 = sadd.s32 %s563, %s564
      %s566 = smul.addr %s565, 8
      %s567 = scalar_lea.vmem %s0, %s566
      %p568 = scmp.lt.s32.totalorder %s30, 1
      %s569 = scalar_select %p568, %s30, 1
      %p570 = scmp.lt.s32.totalorder %s31, 0
      %s571 = scalar_select %p570, %s31, 0
      %s572 = sadd.s32 %s571, %s569
      %s573 = smul.addr %s572, 8
      %s574 = scalar_lea.vmem %s1, %s573
      %p575 = scmp.lt.s32.totalorder %s30, 1
      %s576 = scalar_select %p575, %s30, 1
      %p577 = scmp.lt.s32.totalorder %s31, 0
      %s578 = scalar_select %p577, %s31, 0
      %s579 = sadd.s32 %s578, %s576
      %s580 = smul.addr %s579, 8
      %s581 = scalar_lea.vmem %s2, %s580
      %p582 = scmp.lt.s32.totalorder %s30, 1
      %s583 = scalar_select %p582, %s30, 1
      %s584 = smul.addr %s583, 2
      %s585 = smul.addr %s584, 8
      %s586 = scalar_lea.vmem %s3, %s585
      %p587 = scmp.lt.s32.totalorder %s30, 1
      %s588 = scalar_select %p587, %s30, 1
      %p589 = scmp.lt.s32.totalorder %s31, 0
      %s590 = scalar_select %p589, %s31, 0
      %s591 = sadd.s32 %s590, %s588
      %s592 = smul.addr %s591, 8
      %s593 = scalar_lea.vmem %s12, %s592
      %p594 = scmp.lt.s32.totalorder %s30, 1
      %s595 = scalar_select %p594, %s30, 1
      %p596 = scmp.lt.s32.totalorder %s31, 0
      %s597 = scalar_select %p596, %s31, 0
      %s598 = sadd.s32 %s597, %s595
      %s599 = smul.addr %s598, 8
      %s600 = scalar_lea.vmem %s13, %s599
      %s601 = sadd.s32 %s30, %s31
      %p602 = scmp.lt.s32.totalorder %s601, 1
      %s603 = scalar_select %p602, %s601, 1
      %s604 = smul.addr %s603, 8
      %s605 = scalar_lea.vmem %s14, %s604
      %s606 = sadd.s32 %s30, %s31
      %v608 = vld [vmem:[%s567] sm:$0xff]
      %v609 = vld [vmem:[%s567 + $0x8] sm:$0xff]
      %v610 = vld [vmem:[%s574] sm:$0xff]
      %v611 = vld [vmem:[%s4] sm:$0xff]
      %v612 = vld [vmem:[%s4 + $0x8] sm:$0xff]
      %v613 = vld [vmem:[%s5] sm:$0xff]
      %v614 = vld [vmem:[%s5 + $0x8] sm:$0xff]
      %v615 = vld [vmem:[%s6] sm:$0xf]
      %v616 = vld [vmem:[%s7] sm:$0xf]
      %618 = vset.pattern.permute.xlu0 0
      %619 = vperm.xlu0 %618, %v611
      %v620 = vpop.permute.xlu0 %619
      %623 = vset.pattern.permute.xlu0 0
      %624 = vperm.xlu0 %623, %v612
      %v625 = vpop.permute.xlu0 %624
      %v627 = vmul.f32 %v608, %v620
      %v628 = vmul.f32 %v609, %v625
      %630 = vset.pattern.permute.xlu0 0
      %631 = vperm.xlu0 %630, %v613
      %v632 = vpop.permute.xlu0 %631
      %635 = vset.pattern.permute.xlu0 0
      %636 = vperm.xlu0 %635, %v614
      %v637 = vpop.permute.xlu0 %636
      %v639 = vadd.f32 %v627, %v632
      %v640 = vadd.f32 %v628, %v637
      %v641 = vmax.f32 %v639, 0.0
      %v642 = vmax.f32 %v640, 0.0
      %v643 = vmul.f32 %v641, %v641
      %v644 = vmul.f32 %v642, %v642
      %vm645 = vcmask 130048
      %v646 = vsel %vm645, %v643, 0.0
      %v647 = vsel %vm645, %v644, 0.0
      %v648 = vadd.f32 %v646, %v647
      %v649 = vrot.slane %v648, 4
      %v650 = vadd.f32 %v648, %v649
      %v651 = vrot.slane %v650, 2
      %v652 = vadd.f32 %v650, %v651
      %v653 = vrot.slane %v652, 1
      %v654 = vadd.f32 %v652, %v653
      %v655 = vmax.f32 %v654, 1e-24
      %v656 = vrsqrt.pop %v655
      %v657 = vmul.f32 %v641, %v656
      %v658 = vmul.f32 %v642, %v656
      %v659 = vpack.c.bf16 %v658, %v657
      %v661 = vsel %vm645, %v615, 0
      %663 = vmatprep.subr.bf16.mxu0 0
      %664 = vmatpush1.bf16.msra.mxu0 %v659
      %665 = vmatprep.subr.bf16.mxu0 0
      %666 = vmatpush1.bf16.msra.mxu0 0
      %667 = vmatprep.subr.bf16.mxu0 0
      %668 = vmatpush1.bf16.msra.mxu0 0
      %669 = vmatprep.subr.bf16.mxu0 0
      %670 = vmatpush1.bf16.msra.mxu0 0
      %671 = vmatprep.subr.bf16.mxu0 0
      %672 = vmatpush1.bf16.msra.mxu0 0
      %673 = vmatprep.subr.bf16.mxu0 0
      %674 = vmatpush1.bf16.msra.mxu0 0
      %675 = vmatprep.subr.bf16.mxu0 0
      %676 = vmatpush1.bf16.msra.mxu0 0
      %677 = vmatprep.subr.bf16.mxu0 0
      %678 = vmatpush1.bf16.msra.mxu0 0
      %679 = vmatprep.subr.bf16.mxu0 0
      %680 = vmatpush1.bf16.msra.mxu0 0
      %681 = vmatprep.subr.bf16.mxu0 0
      %682 = vmatpush1.bf16.msra.mxu0 0
      %683 = vmatprep.subr.bf16.mxu0 0
      %684 = vmatpush1.bf16.msra.mxu0 0
      %685 = vmatprep.subr.bf16.mxu0 0
      %686 = vmatpush1.bf16.msra.mxu0 0
      %687 = vmatprep.subr.bf16.mxu0 0
      %688 = vmatpush1.bf16.msra.mxu0 0
      %689 = vmatprep.subr.bf16.mxu0 0
      %690 = vmatpush1.bf16.msra.mxu0 0
      %691 = vmatprep.subr.bf16.mxu0 0
      %692 = vmatpush1.bf16.msra.mxu0 0
      %693 = vmatprep.subr.bf16.mxu0 0
      %694 = vmatpush1.bf16.msra.mxu0 0
      %695 = vmatprep.mubr.bf16.mxu0 0
      %696 = vmatmul.mubr.bf16.gmra.mrb[0].mxu0 %v661
      %v697 = vpop.f32.mrb[0].mxu0
      %v698 = vadd.f32 0.0, %v697
      %v699 = vpop.f32.mrb[0].mxu0
      %v700 = vpop.f32.mrb[0].mxu0
      %v701 = vpop.f32.mrb[0].mxu0
      %702 = vdwg.mxu0
      %v703 = vpack.c.bf16 %v610, %v610
      %vm704 = vcmask 64512
      %v706 = vsel %vm704, %v616, 0
      %vm708 = vcmask 1043456
      %v710 = vsel %vm708, %v703, 0
      %712 = vmatprep.subr.bf16.mxu0 0
      %713 = vmatpush1.bf16.msra.mxu0 %v710
      %714 = vmatprep.subr.bf16.mxu0 0
      %715 = vmatpush1.bf16.msra.mxu0 0
      %716 = vmatprep.subr.bf16.mxu0 0
      %717 = vmatpush1.bf16.msra.mxu0 0
      %718 = vmatprep.subr.bf16.mxu0 0
      %719 = vmatpush1.bf16.msra.mxu0 0
      %720 = vmatprep.subr.bf16.mxu0 0
      %721 = vmatpush1.bf16.msra.mxu0 0
      %722 = vmatprep.subr.bf16.mxu0 0
      %723 = vmatpush1.bf16.msra.mxu0 0
      %724 = vmatprep.subr.bf16.mxu0 0
      %725 = vmatpush1.bf16.msra.mxu0 0
      %726 = vmatprep.subr.bf16.mxu0 0
      %727 = vmatpush1.bf16.msra.mxu0 0
      %728 = vmatprep.subr.bf16.mxu0 0
      %729 = vmatpush1.bf16.msra.mxu0 0
      %730 = vmatprep.subr.bf16.mxu0 0
      %731 = vmatpush1.bf16.msra.mxu0 0
      %732 = vmatprep.subr.bf16.mxu0 0
      %733 = vmatpush1.bf16.msra.mxu0 0
      %734 = vmatprep.subr.bf16.mxu0 0
      %735 = vmatpush1.bf16.msra.mxu0 0
      %736 = vmatprep.subr.bf16.mxu0 0
      %737 = vmatpush1.bf16.msra.mxu0 0
      %738 = vmatprep.subr.bf16.mxu0 0
      %739 = vmatpush1.bf16.msra.mxu0 0
      %740 = vmatprep.subr.bf16.mxu0 0
      %741 = vmatpush1.bf16.msra.mxu0 0
      %742 = vmatprep.subr.bf16.mxu0 0
      %743 = vmatpush1.bf16.msra.mxu0 0
      %744 = vmatprep.mubr.bf16.mxu0 0
      %745 = vmatmul.mubr.bf16.gmra.mrb[0].mxu0 %v706
      %v746 = vpop.f32.mrb[0].mxu0
      %v747 = vadd.f32 0.0, %v746
      %v748 = vpop.f32.mrb[0].mxu0
      %v749 = vpop.f32.mrb[0].mxu0
      %v750 = vpop.f32.mrb[0].mxu0
      %751 = vdwg.mxu0
      %v752 = vadd.f32 %v698, %v747
      %753 = vst.msk [vmem:[%s600] sm:$0xff] %vm645, %v698
      %754 = vst.msk [vmem:[%s593] sm:$0xff] %vm645, %v752
      %v755 = vld [vmem:[%s581] sm:$0xff]
      %v756 = vld [vmem:[%s9] sm:$0xff]
      %v757 = vld [vmem:[%s9 + $0x8] sm:$0xff]
      %v758 = vmul.f32 %v755, %v755
      %v759 = vsel %vm645, %v758, 0.0
      %v760 = vrot.slane %v759, 4
      %v761 = vadd.f32 %v759, %v760
      %v762 = vrot.slane %v761, 2
      %v763 = vadd.f32 %v761, %v762
      %v764 = vrot.slane %v763, 1
      %v765 = vadd.f32 %v763, %v764
      %767 = vset.pattern.permute.xlu0 0
      %768 = vperm.xlu0 %767, %v756
      %v769 = vpop.permute.xlu0 %768
      %772 = vset.pattern.permute.xlu0 0
      %773 = vperm.xlu0 %772, %v757
      %v774 = vpop.permute.xlu0 %773
      %v776 = vadd.f32 %v769, %v765
      %v777 = vadd.f32 %v774, %v765
      %v778 = vld [vmem:[%s8] sm:$0xff]
      %v779 = vld [vmem:[%s8 + $0x8] sm:$0xff]
      %v781 = vsel %vm704, %v778, 0
      %v784 = vsel %vm704, %v779, 0
      %786 = vmatprep.subr.mxu0 0.0
      %787 = vmatpush1.msra.mxu0 %v755
      %788 = vmatprep.subr.mxu0 0.0
      %789 = vmatpush1.msra.mxu0 0.0
      %790 = vmatprep.subr.mxu0 0.0
      %791 = vmatpush1.msra.mxu0 0.0
      %792 = vmatprep.subr.mxu0 0.0
      %793 = vmatpush1.msra.mxu0 0.0
      %794 = vmatprep.subr.mxu0 0.0
      %795 = vmatpush1.msra.mxu0 0.0
      %796 = vmatprep.subr.mxu0 0.0
      %797 = vmatpush1.msra.mxu0 0.0
      %798 = vmatprep.subr.mxu0 0.0
      %799 = vmatpush1.msra.mxu0 0.0
      %800 = vmatprep.subr.mxu0 0.0
      %801 = vmatpush1.msra.mxu0 0.0
      %802 = vmatprep.subr.mxu0 0.0
      %803 = vmatpush1.msra.mxu0 0.0
      %804 = vmatprep.subr.mxu0 0.0
      %805 = vmatpush1.msra.mxu0 0.0
      %806 = vmatprep.subr.mxu0 0.0
      %807 = vmatpush1.msra.mxu0 0.0
      %808 = vmatprep.subr.mxu0 0.0
      %809 = vmatpush1.msra.mxu0 0.0
      %810 = vmatprep.subr.mxu0 0.0
      %811 = vmatpush1.msra.mxu0 0.0
      %812 = vmatprep.subr.mxu0 0.0
      %813 = vmatpush1.msra.mxu0 0.0
      %814 = vmatprep.subr.mxu0 0.0
      %815 = vmatpush1.msra.mxu0 0.0
      %816 = vmatprep.subr.mxu0 0.0
      %817 = vmatpush1.msra.mxu0 0.0
      %818 = vmatprep.subr.mxu0 0.0
      %819 = vmatpush1.msra.mxu0 0.0
      %820 = vmatprep.subr.mxu0 0.0
      %821 = vmatpush1.msra.mxu0 0.0
      %822 = vmatprep.subr.mxu0 0.0
      %823 = vmatpush1.msra.mxu0 0.0
      %824 = vmatprep.subr.mxu0 0.0
      %825 = vmatpush1.msra.mxu0 0.0
      %826 = vmatprep.subr.mxu0 0.0
      %827 = vmatpush1.msra.mxu0 0.0
      %828 = vmatprep.subr.mxu0 0.0
      %829 = vmatpush1.msra.mxu0 0.0
      %830 = vmatprep.subr.mxu0 0.0
      %831 = vmatpush1.msra.mxu0 0.0
      %832 = vmatprep.subr.mxu0 0.0
      %833 = vmatpush1.msra.mxu0 0.0
      %834 = vmatprep.subr.mxu0 0.0
      %835 = vmatpush1.msra.mxu0 0.0
      %836 = vmatprep.subr.mxu0 0.0
      %837 = vmatpush1.msra.mxu0 0.0
      %838 = vmatprep.subr.mxu0 0.0
      %839 = vmatpush1.msra.mxu0 0.0
      %840 = vmatprep.subr.mxu0 0.0
      %841 = vmatpush1.msra.mxu0 0.0
      %842 = vmatprep.subr.mxu0 0.0
      %843 = vmatpush1.msra.mxu0 0.0
      %844 = vmatprep.subr.mxu0 0.0
      %845 = vmatpush1.msra.mxu0 0.0
      %846 = vmatprep.subr.mxu0 0.0
      %847 = vmatpush1.msra.mxu0 0.0
      %848 = vmatprep.subr.mxu0 0.0
      %849 = vmatpush1.msra.mxu0 0.0
      %850 = vmatprep.mubr.f32.mxu0 0.0
      %851 = vmatmul.mubr.f32.gmra.mrb[0].mxu0 %v781
      %v852 = vpop.f32.mrb[0].mxu0
      %v853 = vadd.f32 0.0, %v852
      %v854 = vpop.f32.mrb[0].mxu0
      %855 = vmatprep.mubr.f32.mxu0 0.0
      %856 = vmatmul.mubr.f32.gmra.mrb[0].mxu0 %v784
      %v857 = vpop.f32.mrb[0].mxu0
      %v858 = vadd.f32 0.0, %v857
      %v859 = vpop.f32.mrb[0].mxu0
      %860 = vdwg.mxu0
      %v861 = vmul.f32 %v853, 2.0
      %v862 = vmul.f32 %v858, 2.0
      %v863 = vsub.f32 %v776, %v861
      %v864 = vsub.f32 %v777, %v862
      %v865 = vsel %vm645, %v863, -inf
      %v866 = vsel %vm645, %v864, -inf
      %v867 = vmax.f32 %v865, %v866
      %v868 = vrot.slane %v867, 4
      %v869 = vmax.f32 %v867, %v868
      %v870 = vrot.slane %v869, 2
      %v871 = vmax.f32 %v869, %v870
      %v872 = vrot.slane %v871, 1
      %v873 = vmax.f32 %v871, %v872
      %v874 = vld [vmem:[%s586] sm:$0xff]
      %v875 = vld [vmem:[%s586 + $0x8] sm:$0xff]
      %v876 = vsub.f32 %v873, %v863
      %v877 = vsub.f32 %v873, %v864
      %879 = vset.pattern.permute.xlu0 0
      %880 = vperm.xlu0 %879, %v874
      %v881 = vpop.permute.xlu0 %880
      %884 = vset.pattern.permute.xlu0 0
      %885 = vperm.xlu0 %884, %v875
      %v886 = vpop.permute.xlu0 %885
      %v888 = vmul.f32 %v881, %v876
      %v889 = vmul.f32 %v886, %v877
      %v890 = vsel %vm645, %v888, -inf
      %v891 = vsel %vm645, %v889, -inf
      %v892 = vmax.f32 %v890, %v891
      %v893 = vrot.slane %v892, 4
      %v894 = vmax.f32 %v892, %v893
      %v895 = vrot.slane %v894, 2
      %v896 = vmax.f32 %v894, %v895
      %v897 = vrot.slane %v896, 1
      %v898 = vmax.f32 %v896, %v897
      %v899 = vlaneseq
      %v900 = vshrl.u32 %v899, 7
      %v901 = vadd.s32 %v900, 8
      %vm902 = vcmp.eq.f32.partialorder %v888, %v898
      %vm903 = vcmp.eq.f32.partialorder %v889, %v898
      %v904 = vsel %vm902, %v900, 16
      %v905 = vsel %vm903, %v901, 16
      %v906 = vsel %vm645, %v904, 2147483647
      %v907 = vsel %vm645, %v905, 2147483647
      %vm908 = vcmp.lt.s32.totalorder %v906, %v907
      %v909 = vsel %vm908, %v906, %v907
      %v910 = vrot.slane %v909, 4
      %vm911 = vcmp.lt.s32.totalorder %v909, %v910
      %v912 = vsel %vm911, %v909, %v910
      %v913 = vrot.slane %v912, 2
      %vm914 = vcmp.lt.s32.totalorder %v912, %v913
      %v915 = vsel %vm914, %v912, %v913
      %v916 = vrot.slane %v915, 1
      %vm917 = vcmp.lt.s32.totalorder %v915, %v916
      %v918 = vsel %vm917, %v915, %v916
      %vm919 = vcmp.eq.s32.totalorder %v900, %v918
      %vm920 = vcmp.eq.s32.totalorder %v901, %v918
      %v921 = vsel %vm919, 1, 0
      %v922 = vsel %vm920, 1, 0
      %v923 = vcvt.s32.f32 %v921
      %v924 = vcvt.s32.f32 %v922
      %v925 = vld [vmem:[%s11] sm:$0xff]
      %v926 = vld [vmem:[%s11 + $0x8] sm:$0xff]
      %v928 = vsel %vm645, %v925, 0
      %v931 = vsel %vm645, %v926, 0
      %933 = vmatprep.subr.mxu0 0.0
      %934 = vmatpush1.msra.mxu0 %v923
      %935 = vmatprep.subr.mxu0 0.0
      %936 = vmatpush1.msra.mxu0 %v924
      %937 = vmatprep.subr.mxu0 0.0
      %938 = vmatpush1.msra.mxu0 0.0
      %939 = vmatprep.subr.mxu0 0.0
      %940 = vmatpush1.msra.mxu0 0.0
      %941 = vmatprep.subr.mxu0 0.0
      %942 = vmatpush1.msra.mxu0 0.0
      %943 = vmatprep.subr.mxu0 0.0
      %944 = vmatpush1.msra.mxu0 0.0
      %945 = vmatprep.subr.mxu0 0.0
      %946 = vmatpush1.msra.mxu0 0.0
      %947 = vmatprep.subr.mxu0 0.0
      %948 = vmatpush1.msra.mxu0 0.0
      %949 = vmatprep.subr.mxu0 0.0
      %950 = vmatpush1.msra.mxu0 0.0
      %951 = vmatprep.subr.mxu0 0.0
      %952 = vmatpush1.msra.mxu0 0.0
      %953 = vmatprep.subr.mxu0 0.0
      %954 = vmatpush1.msra.mxu0 0.0
      %955 = vmatprep.subr.mxu0 0.0
      %956 = vmatpush1.msra.mxu0 0.0
      %957 = vmatprep.subr.mxu0 0.0
      %958 = vmatpush1.msra.mxu0 0.0
      %959 = vmatprep.subr.mxu0 0.0
      %960 = vmatpush1.msra.mxu0 0.0
      %961 = vmatprep.subr.mxu0 0.0
      %962 = vmatpush1.msra.mxu0 0.0
      %963 = vmatprep.subr.mxu0 0.0
      %964 = vmatpush1.msra.mxu0 0.0
      %965 = vmatprep.subr.mxu0 0.0
      %966 = vmatpush1.msra.mxu0 0.0
      %967 = vmatprep.subr.mxu0 0.0
      %968 = vmatpush1.msra.mxu0 0.0
      %969 = vmatprep.subr.mxu0 0.0
      %970 = vmatpush1.msra.mxu0 0.0
      %971 = vmatprep.subr.mxu0 0.0
      %972 = vmatpush1.msra.mxu0 0.0
      %973 = vmatprep.subr.mxu0 0.0
      %974 = vmatpush1.msra.mxu0 0.0
      %975 = vmatprep.subr.mxu0 0.0
      %976 = vmatpush1.msra.mxu0 0.0
      %977 = vmatprep.subr.mxu0 0.0
      %978 = vmatpush1.msra.mxu0 0.0
      %979 = vmatprep.subr.mxu0 0.0
      %980 = vmatpush1.msra.mxu0 0.0
      %981 = vmatprep.subr.mxu0 0.0
      %982 = vmatpush1.msra.mxu0 0.0
      %983 = vmatprep.subr.mxu0 0.0
      %984 = vmatpush1.msra.mxu0 0.0
      %985 = vmatprep.subr.mxu0 0.0
      %986 = vmatpush1.msra.mxu0 0.0
      %987 = vmatprep.subr.mxu0 0.0
      %988 = vmatpush1.msra.mxu0 0.0
      %989 = vmatprep.subr.mxu0 0.0
      %990 = vmatpush1.msra.mxu0 0.0
      %991 = vmatprep.subr.mxu0 0.0
      %992 = vmatpush1.msra.mxu0 0.0
      %993 = vmatprep.subr.mxu0 0.0
      %994 = vmatpush1.msra.mxu0 0.0
      %995 = vmatprep.subr.mxu0 0.0
      %996 = vmatpush1.msra.mxu0 0.0
      %997 = vmatprep.mubr.f32.mxu0 0.0
      %998 = vmatmul.mubr.f32.gmra.mrb[0].mxu0 %v928
      %v999 = vpop.f32.mrb[0].mxu0
      %v1000 = vadd.f32 0.0, %v999
      %v1001 = vpop.f32.mrb[0].mxu0
      %1002 = vmatprep.mubr.f32.mxu0 0.0
      %1003 = vmatmul.mubr.f32.gmra.mrb[0].mxu0 %v931
      %v1004 = vpop.f32.mrb[0].mxu0
      %v1005 = vadd.f32 0.0, %v1004
      %v1006 = vpop.f32.mrb[0].mxu0
      %1007 = vdwg.mxu0
      %v1008 = vld [vmem:[%s10] sm:$0xff]
      %v1009 = vld [vmem:[%s10 + $0x8] sm:$0xff]
      %1011 = vset.pattern.permute.xlu0 0
      %1012 = vperm.xlu0 %1011, %v1008
      %v1013 = vpop.permute.xlu0 %1012
      %1016 = vset.pattern.permute.xlu0 0
      %1017 = vperm.xlu0 %1016, %v1009
      %v1018 = vpop.permute.xlu0 %1017
      %v1020 = vmul.f32 %v1013, %v923
      %v1021 = vmul.f32 %v1018, %v924
      %v1022 = vsel %vm645, %v1020, 0.0
      %v1023 = vsel %vm645, %v1021, 0.0
      %v1024 = vadd.f32 %v1022, %v1023
      %v1025 = vrot.slane %v1024, 4
      %v1026 = vadd.f32 %v1024, %v1025
      %v1027 = vrot.slane %v1026, 2
      %v1028 = vadd.f32 %v1026, %v1027
      %v1029 = vrot.slane %v1028, 1
      %v1030 = vadd.f32 %v1028, %v1029
      %v1031 = vsel %vm645, %v608, -inf
      %v1032 = vsel %vm645, %v609, -inf
      %v1033 = vmax.f32 %v1031, %v1032
      %v1034 = vrot.slane %v1033, 4
      %v1035 = vmax.f32 %v1033, %v1034
      %v1036 = vrot.slane %v1035, 2
      %v1037 = vmax.f32 %v1035, %v1036
      %v1038 = vrot.slane %v1037, 1
      %v1039 = vmax.f32 %v1037, %v1038
      %v1040 = vsub.f32 %v608, %v1039
      %v1041 = vsub.f32 %v609, %v1039
      %v1042 = vmul.f32 %v1040, 1.442695
      %v1043 = vpow.pop %v1042
      %v1044 = vmul.f32 %v1041, 1.442695
      %v1045 = vpow.pop %v1044
      %v1046 = vsel %vm645, %v1043, 0.0
      %v1047 = vsel %vm645, %v1045, 0.0
      %v1048 = vadd.f32 %v1046, %v1047
      %v1049 = vrot.slane %v1048, 4
      %v1050 = vadd.f32 %v1048, %v1049
      %v1051 = vrot.slane %v1050, 2
      %v1052 = vadd.f32 %v1050, %v1051
      %v1053 = vrot.slane %v1052, 1
      %v1054 = vadd.f32 %v1052, %v1053
      %v1055 = vlog2.pop %v1054
      %v1056 = vmul.f32 %v1055, 0.6931472
      %v1057 = vadd.f32 %v1039, %v1056
      %v1058 = vsub.f32 %v608, %v1057
      %v1059 = vsub.f32 %v609, %v1057
      %v1060 = vmul.f32 %v1000, %v1058
      %v1061 = vmul.f32 %v1005, %v1059
      %v1062 = vsel %vm645, %v1060, 0.0
      %v1063 = vsel %vm645, %v1061, 0.0
      %v1064 = vadd.f32 %v1062, %v1063
      %v1065 = vrot.slane %v1064, 4
      %v1066 = vadd.f32 %v1064, %v1065
      %v1067 = vrot.slane %v1066, 2
      %v1068 = vadd.f32 %v1066, %v1067
      %v1069 = vrot.slane %v1068, 1
      %v1070 = vadd.f32 %v1068, %v1069
      %v1071 = vsub.f32 %v1030, %v1070
      %v1072 = vlaneseq
      %v1073 = vand.u32 %v1072, 127
      %s1074 = smul.u32 %s31, 16
      %v1075 = vstv %s1074
      %v1076 = vadd.s32 %v1075, %v1073
      %vm1077 = vcmp.lt.s32.totalorder %v1076, 16
      %v1078 = vsel %vm1077, %v1071, 0.0
      %vm1079 = vcmask 122880
      %v1080 = vsel %vm1079, %v1078, 0.0
      %1081 = vadd.xlane.f32.xlu0 %v1080
      %v1082 = vpop.xlane.xlu0 %1081
      %v1083 = vrot.slane %v1082, 4
      %v1084 = vadd.f32 %v1082, %v1083
      %v1085 = vrot.slane %v1084, 2
      %v1086 = vadd.f32 %v1084, %v1085
      %v1087 = vrot.slane %v1086, 1
      %v1088 = vadd.f32 %v1086, %v1087
      %s1089 = vtos %v1088
      %vm1090 = vcmp.eq.s32.totalorder %v900, 0
      %vm1091 = vcmp.eq.s32.totalorder %v1073, 0
      %vm1092 = vmand %vm1090, %vm1091
      %v1093 = vstv %s1089
      %v1094 = vsel %vm1092, %v1093, 0.0
      %1095 = vst [vmem:[%s605] sm:$0xff] %v1094
      %p1096 = scmp.lt.s32.totalorder %s30, 1
      %s1097 = scalar_select %p1096, %s30, 1
      %p1098 = scmp.lt.s32.totalorder %s31, 0
      %s1099 = scalar_select %p1098, %s31, 0
      %s1100 = sadd.s32 %s1099, %s1097
      %s1101 = smul.addr %s1100, 8
      %s1102 = scalar_lea.vmem %s12, %s1101
      %p1103 = scmp.lt.s32.totalorder %s30, 1
      %s1104 = scalar_select %p1103, %s30, 1
      %p1105 = scmp.lt.s32.totalorder %s31, 0
      %s1106 = scalar_select %p1105, %s31, 0
      %s1107 = sadd.s32 %s1106, %s1104
      %s1108 = smul.addr %s1107, 8
      %s1109 = scalar_lea.vmem %s13, %s1108
      %s1110 = sadd.s32 %s30, %s31
      %p1111 = scmp.lt.s32.totalorder %s1110, 1
      %s1112 = scalar_select %p1111, %s1110, 1
      %s1113 = smul.addr %s1112, 8
      %s1114 = scalar_lea.vmem %s14, %s1113
      // Predicated region
      $region69: #{_forward_impl.1} parent=67 // pred_check
        %p1115 = pneg %p336
      $region70: #{_forward_impl.1} parent=67 // pred_check_branch
        %1117 = sbr.rel (%p1115) target = $region72
      $region71: #{_forward_impl.1} parent=67 // pred_region
        _
      $region72: #{_forward_impl.1} parent=67 // pred_fallthru
        _
      // Predicated region
      $region73: #{_forward_impl.1} parent=67 // pred_check
        %p1118 = pneg %p364
      $region74: #{_forward_impl.1} parent=67 // pred_check_branch
        %1120 = sbr.rel (%p1118) target = $region76
      $region75: #{_forward_impl.1} parent=67 // pred_region
        _
      $region76: #{_forward_impl.1} parent=67 // pred_fallthru
        _
      // Predicated region
      $region77: #{_forward_impl.1} parent=67 // pred_check
        %p1121 = pneg %p392
      $region78: #{_forward_impl.1} parent=67 // pred_check_branch
        %1123 = sbr.rel (%p1121) target = $region80
      $region79: #{_forward_impl.1} parent=67 // pred_region
        %s1124 = sadd.s32 %s30, %s31
      $region80: #{_forward_impl.1} parent=67 // pred_fallthru
        _
    $region68: #{_forward_impl.1} parent=5 // pred_fallthru
      _
    %p1125 = scmp.le.s32.totalorder 2, %s21
    // Predicated region
    $region81: #{_forward_impl.1} parent=5 // pred_check
      %p1126 = pneg %p1125
    $region82: #{_forward_impl.1} parent=5 // pred_check_branch
      %1128 = sbr.rel (%p1126) target = $region84
    $region83: #{_forward_impl.1} parent=5 // pred_region
      %s1129 = ssub.s32 %s21, 2
      // Predicated region
      $region85: #{_forward_impl.1} parent=83 // pred_check
        %p1130 = pneg %p342
      $region86: #{_forward_impl.1} parent=83 // pred_check_branch
        %1132 = sbr.rel (%p1130) target = $region88
      $region87: #{_forward_impl.1} parent=83 // pred_region
        %p1133 = scmp.lt.s32.totalorder %s32, 1
        %s1134 = scalar_select %p1133, %s32, 1
        %p1135 = scmp.lt.s32.totalorder %s33, 0
        %s1136 = scalar_select %p1135, %s33, 0
        %s1137 = sadd.s32 %s1136, %s1134
        %s1138 = smul.addr %s1137, 8
        %s1139 = scalar_lea.vmem %s12, %s1138
      $region88: #{_forward_impl.1} parent=83 // pred_fallthru
        _
      // Predicated region
      $region89: #{_forward_impl.1} parent=83 // pred_check
        %p1140 = pneg %p370
      $region90: #{_forward_impl.1} parent=83 // pred_check_branch
        %1142 = sbr.rel (%p1140) target = $region92
      $region91: #{_forward_impl.1} parent=83 // pred_region
        %p1143 = scmp.lt.s32.totalorder %s32, 1
        %s1144 = scalar_select %p1143, %s32, 1
        %p1145 = scmp.lt.s32.totalorder %s33, 0
        %s1146 = scalar_select %p1145, %s33, 0
        %s1147 = sadd.s32 %s1146, %s1144
        %s1148 = smul.addr %s1147, 8
        %s1149 = scalar_lea.vmem %s13, %s1148
      $region92: #{_forward_impl.1} parent=83 // pred_fallthru
        _
      // Predicated region
      $region93: #{_forward_impl.1} parent=83 // pred_check
        %p1150 = pneg %p398
      $region94: #{_forward_impl.1} parent=83 // pred_check_branch
        %1152 = sbr.rel (%p1150) target = $region96
      $region95: #{_forward_impl.1} parent=83 // pred_region
        %s1153 = sadd.s32 %s32, %s33
        %p1154 = scmp.lt.s32.totalorder %s1153, 1
        %s1155 = scalar_select %p1154, %s1153, 1
        %s1156 = smul.addr %s1155, 8
        %s1157 = scalar_lea.vmem %s14, %s1156
      $region96: #{_forward_impl.1} parent=83 // pred_fallthru
        _
    $region84: #{_forward_impl.1} parent=5 // pred_fallthru
      _
  $region6: #{_forward_impl.1} parent=0 // loop_footer
    %s25 = sadd.s32 1, %s21
  $region7: #{_forward_impl.1} parent=0 // loop_footer_branch
    %20 = sbr.rel target = $region3
  $region8: #{_forward_impl.1} parent=0 // loop_exit
    _

</llo_original>
